<compile_context>
chip_gen: v7x
topology: tpu7x:2x2x1
jax: 0.10.0
libtpu: 0.0.40
codegen_flags: <defaults>
</compile_context>

<pallas_src>
import math
import numpy as np
import jax
import jax.numpy as jnp
from jax.experimental import pallas as pl
from jax.experimental.pallas import tpu as pltpu

# ----------------------------------------------------------------------------
# Configuration:  WignerKernel(clebsch(lmax=2), lambda_max=2, num_iterations=2)
LMAX = 2
LAMBDA_MAX = LMAX          # "main" blocks; the "last" block uses lambda_max = 0
NUM_ITERATIONS = 2
BATCH = 16

NL = LMAX + 1              # number of angular channels l = 0..LMAX
D = 2 * LMAX + 1           # common (padded) 2l+1 size           (= 5)
F = NL * D * D             # flattened (l, m, n) feature size    (= 75)
GSUB = 8                   # i-chunk size (sublane granule)
NCHUNK = (F + GSUB - 1) // GSUB      # number of i-chunks        (= 10)
FPAD = NCHUNK * GSUB       # padded feature size for i and j     (= 80)
POUT = 128                 # lane-dense padded (lam, mu, nu) output size

# Coefficient-streaming granularity: i-chunks per grid step (see header note).
CHUNKS_PER_STEP = 2
assert NCHUNK % CHUNKS_PER_STEP == 0
GRID_STEPS = NCHUNK // CHUNKS_PER_STEP


# --------------------- Clebsch-Gordan "parameters" ---------------------------
def _cg(j1, m1, j2, m2, j, m):
    """<j1 m1 j2 m2 | j m> via the Racah formula (deterministic, no files)."""
    if m1 + m2 != m:
        return 0.0
    if j < abs(j1 - j2) or j > j1 + j2:
        return 0.0
    if abs(m1) > j1 or abs(m2) > j2 or abs(m) > j:
        return 0.0
    f = math.factorial
    pref = (2 * j + 1) * f(j + j1 - j2) * f(j - j1 + j2) * f(j1 + j2 - j) \
        / f(j1 + j2 + j + 1)
    pref *= f(j + m) * f(j - m) * f(j1 - m1) * f(j1 + m1) * f(j2 - m2) * f(j2 + m2)
    pref = math.sqrt(pref)
    total = 0.0
    for k in range(0, j1 + j2 + j + 1):
        denoms = (k, j1 + j2 - j - k, j1 - m1 - k, j2 + m2 - k,
                  j - j2 + m1 + k, j - j1 - m2 + k)
        if min(denoms) < 0:
            continue
        prod = 1.0
        for d in denoms:
            prod *= float(f(d))
        total += (-1.0) ** k / prod
    return pref * total


def _padded_cg_tensor(lambda_count):
    """C[l1, l2, lam, m1, m2, mu], zero outside the valid (2l+1) ranges."""
    C = np.zeros((NL, NL, lambda_count, D, D, D), dtype=np.float64)
    for l1 in range(NL):
        for l2 in range(NL):
            for lam in range(lambda_count):
                if lam < abs(l1 - l2) or lam > l1 + l2:
                    continue
                for m1 in range(2 * l1 + 1):
                    for m2 in range(2 * l2 + 1):
                        mu = (m1 - l1) + (m2 - l2) + lam
                        if 0 <= mu < 2 * lam + 1:
                            C[l1, l2, lam, m1, m2, mu] = _cg(
                                l1, m1 - l1, l2, m2 - l2, lam, mu - lam)
    return C


def _build_cc_main(C):
    """Combining coefficients for a lambda_max=LMAX step.

    Returns [NCHUNK, FPAD, GSUB*POUT] f32 with
        cc[c, j, g*POUT + p] = CC[i = c*GSUB + g, j, p],
        CC[i, j, p] = C^{lam mu}_{l1 m1 l2 m2} * C^{lam nu}_{l1 n1 l2 n2}
    for flat indices i=(l1,m1,n1), j=(l2,m2,n2), p=(lam,mu,nu); zero padded.
    """
    CC = np.einsum('abcdef,abcghi->adgbehcfi', C, C).reshape(F, F, F)  # [i,j,p]
    CCp = np.zeros((FPAD, FPAD, POUT), dtype=np.float64)
    CCp[:F, :F, :F] = CC
    CCk = CCp.reshape(NCHUNK, GSUB, FPAD, POUT).transpose(0, 2, 1, 3)
    return CCk.reshape(NCHUNK, FPAD, GSUB * POUT).astype(np.float32)


def _build_cc_last():
    """Final lambda_max=0 coefficients, transposed for the kernel matmul.

    Returns [FPAD, POUT] f32 with cc0T[j, i] = CC0[i, j], zero padded.
    """
    C0 = _padded_cg_tensor(1)[:, :, 0, :, :, 0]                  # [l1, l2, m1, m2]
    CC0 = np.einsum('abcd,abef->acebdf', C0, C0).reshape(F, F)   # [i, j]
    out = np.zeros((FPAD, POUT), dtype=np.float64)
    out[:F, :F] = CC0.T
    return out.astype(np.float32)


# --------------------------- layout packing (glue) ---------------------------
def pack_wigner_dict(X_dict):
    """dict {l: [B, 2l+1, 2l+1]} -> [B, FPAD] batch-in-sublanes/feature-in-lanes."""
    B = X_dict[0].shape[0]
    cols = []
    for l in range(NL):
        d = 2 * l + 1
        blk = jnp.pad(X_dict[l], ((0, 0), (0, D - d), (0, D - d)))   # [B, D, D]
        cols.append(blk.reshape(B, D * D))
    packed = jnp.concatenate(cols, axis=1)                           # [B, F]
    return jnp.pad(packed, ((0, 0), (0, FPAD - F))).astype(jnp.float32)


# ------------------------------ Pallas kernel ---------------------------------
def _fused_wigner_kernel(x_ref, xchunk_ref, cc_ref, cc0_ref, o_ref,
                         ycache_ref, wig1_ref, y0_ref, wigc_ref):
    s = pl.program_id(0)
    x = x_ref[...]                                    # [B, FPAD] f32
    x_bf = x.astype(jnp.bfloat16)                     # bf16 LHS for MXU dots

    @pl.when(s == 0)
    def _init():
        if NUM_ITERATIONS >= 1:
            wig1_ref[...] = jnp.zeros_like(wig1_ref)
        # y0 depends only on X: compute it under the coefficient stream so the
        # final lambda=0 contraction has no serial-epilogue matmul/DMA.
        y0_ref[...] = jnp.dot(x_bf, cc0_ref[...],
                              preferred_element_type=jnp.float32)

    if NUM_ITERATIONS >= 1:
        acc = wig1_ref[...]                           # [B, POUT] f32
        for k in range(CHUNKS_PER_STEP):
            c = s * CHUNKS_PER_STEP + k               # global i-chunk index
            # Stage 1 (MXU), overlapped with the next step's coefficient DMA:
            #   Y_c[b, g*POUT + p] = sum_j CC[c*GSUB + g, j, p] * x[b, j]
            yc = jnp.dot(x_bf, cc_ref[k], preferred_element_type=jnp.float32)
            ycache_ref[c] = yc                        # cache for iterations >= 2
            # Stage 2, iteration 1, chunk-c partials (wig_0 = X already known):
            #   wig1[b, p] += sum_g x[b, c*GSUB + g] * Y_c[b, g*POUT + p]
            xc = xchunk_ref[k]                        # [B, GSUB] f32
            for g in range(GSUB):
                acc = acc + xc[:, g:g + 1] * yc[:, g * POUT:(g + 1) * POUT]
        wig1_ref[...] = acc

    @pl.when(s == GRID_STEPS - 1)
    def _finalize():
        if NUM_ITERATIONS >= 1:
            wig = wig1_ref[...]                       # [B, POUT] f32
            # Iterations 2..NUM_ITERATIONS:
            #   wig_{t+1}[b, p] = sum_i wig_t[b, i] * Y[b, i, p]
            for _ in range(1, NUM_ITERATIONS):
                # Re-chunk wig into a [NCHUNK, B, GSUB] scratch so the rolled
                # fori_loop below needs no dynamic lane slicing.
                for ci in range(NCHUNK):
                    wigc_ref[ci] = wig[:, ci * GSUB:(ci + 1) * GSUB]

                def chunk_body(ci, a):
                    ycb = ycache_ref[ci]              # [B, GSUB*POUT] f32
                    wcb = wigc_ref[ci]                # [B, GSUB] f32
                    for g in range(GSUB):
                        a = a + wcb[:, g:g + 1] * ycb[:, g * POUT:(g + 1) * POUT]
                    return a

                wig = jax.lax.fori_loop(
                    0, NCHUNK, chunk_body, jnp.zeros((BATCH, POUT), jnp.float32))
        else:
            # No main blocks: the last step combines X with X directly.
            wig = jnp.concatenate(
                [x, jnp.zeros((BATCH, POUT - FPAD), jnp.float32)], axis=1)
        # Final lambda_max = 0 step, keep only the (lam, mu, nu) = (0, 0, 0)
        # component:  o[b] = sum_{i,j} CC0[i,j] wig[b,i] x[b,j]
        #                  = sum_i wig[b, i] * y0[b, i]
        o_ref[...] = jnp.sum(wig * y0_ref[...], axis=1, keepdims=True)


def _pallas_forward(x_packed, x_chunks, cc_main, cc_last):
    flops = (NCHUNK * 2 * BATCH * FPAD * (GSUB * POUT)      # stage-1 dots
             + 2 * BATCH * FPAD * POUT                      # y0 dot
             + NUM_ITERATIONS * 2 * BATCH * FPAD * POUT)    # stage-2 FMAs
    bytes_accessed = (cc_main.size * cc_main.dtype.itemsize
                      + cc_last.size * cc_last.dtype.itemsize
                      + 4 * (x_packed.size + x_chunks.size + BATCH))
    return pl.pallas_call(
        _fused_wigner_kernel,
        out_shape=jax.ShapeDtypeStruct((BATCH, 1), jnp.float32),
        grid=(GRID_STEPS,),
        in_specs=[
            pl.BlockSpec((BATCH, FPAD), lambda s: (0, 0)),                  # x (resident)
            pl.BlockSpec((CHUNKS_PER_STEP, BATCH, GSUB),
                         lambda s: (s, 0, 0)),                              # x, chunk layout
            pl.BlockSpec((CHUNKS_PER_STEP, FPAD, GSUB * POUT),
                         lambda s: (s, 0, 0)),                              # cc_main (streamed)
            pl.BlockSpec((FPAD, POUT), lambda s: (0, 0)),                   # cc_last (resident)
        ],
        out_specs=pl.BlockSpec((BATCH, 1), lambda s: (0, 0)),
        scratch_shapes=[
            pltpu.VMEM((NCHUNK, BATCH, GSUB * POUT), jnp.float32),   # Y cache (640 KB)
            pltpu.VMEM((BATCH, POUT), jnp.float32),                  # wig_1 accumulator
            pltpu.VMEM((BATCH, POUT), jnp.float32),                  # y0
            pltpu.VMEM((NCHUNK, BATCH, GSUB), jnp.float32),          # chunked wig
        ],
        compiler_params=pltpu.CompilerParams(
            dimension_semantics=("arbitrary",)),    # scratch carries across steps
        cost_estimate=pl.CostEstimate(flops=flops, transcendentals=0,
                                      bytes_accessed=bytes_accessed),
    )(x_packed, x_chunks, cc_main, cc_last)


@jax.jit
def wigner_kernel_forward(x_packed, x_chunks, cc_main, cc_last):
    # forward(X): wig = X; for block in main: wig = block(wig, X)
    #             return last(wig, X)['0'][:, 0, 0]
    return _pallas_forward(x_packed, x_chunks, cc_main, cc_last)[:, 0]   # [BATCH]


# ------------------------ references (host-side checks) ----------------------
def _reference_forward(X_dict_np, C):
    """Torch-style per-(l1,l2,lambda) reference, float64, raw CG coefficients."""
    def combine(X1, X2, lambda_max):
        result = {}
        for l1 in range(NL):
            for l2 in range(NL):
                for lam in range(abs(l1 - l2), min(l1 + l2, lambda_max) + 1):
                    c = C[l1, l2, lam, :2 * l1 + 1, :2 * l2 + 1, :2 * lam + 1]
                    contrib = np.einsum('abu,cdv,nac,nbd->nuv',
                                        c, c, X1[l1], X2[l2])
                    result[lam] = result.get(lam, 0.0) + contrib
        return result

    wig = X_dict_np
    for _ in range(NUM_ITERATIONS):
        wig = combine(wig, X_dict_np, LAMBDA_MAX)
    res = combine(wig, X_dict_np, 0)
    return res[0][:, 0, 0]


def _matched_reference(x_packed, cc_main_bf16, cc_last_bf16):
    """Numpy model of the exact kernel algorithm with the kernel's roundings."""
    x64 = np.asarray(x_packed, dtype=np.float64)                       # exact f32 X
    xb = np.asarray(x_packed.astype(jnp.bfloat16).astype(jnp.float32),
                    dtype=np.float64)                                  # bf16-rounded X
    cc = np.asarray(cc_main_bf16.astype(jnp.float32), dtype=np.float64)
    CCf = cc.reshape(NCHUNK, FPAD, GSUB, POUT).transpose(0, 2, 1, 3) \
            .reshape(FPAD, FPAD, POUT)                                 # CC[i, j, p]
    cc0T = np.asarray(cc_last_bf16.astype(jnp.float32), dtype=np.float64)
    Y = np.einsum('bj,ijp->bip', xb, CCf)                              # [B, FPAD, POUT]
    wig = x64
    for _ in range(NUM_ITERATIONS):
        wig = np.einsum('bi,bip->bp', wig[:, :FPAD], Y)
    if wig.shape[1] < POUT:
        wig = np.pad(wig, ((0, 0), (0, POUT - wig.shape[1])))
    y0 = xb @ cc0T                                                     # [B, POUT]
    return np.sum(wig * y0, axis=1)


# ----------------------------------- main ------------------------------------
if __name__ == "__main__":
    # Deterministic CG "parameters" (the module's only weights).
    C = _padded_cg_tensor(LAMBDA_MAX + 1)
    cc_main = jnp.asarray(_build_cc_main(C), dtype=jnp.bfloat16)   # [10, 80, 1024] bf16 (~1.6 MB)
    cc_last = jnp.asarray(_build_cc_last(), dtype=jnp.bfloat16)    # [80, 128] bf16

    # Deterministic input: dict of Wigner-like matrices {l: [B, 2l+1, 2l+1]}.
    key = jax.random.PRNGKey(0)
    X_dict = {}
    for l in range(NL):
        key, sub = jax.random.split(key)
        d = 2 * l + 1
        X_dict[l] = jax.random.normal(sub, (BATCH, d, d), dtype=jnp.float32)

    x_packed = pack_wigner_dict(X_dict)                               # [B, FPAD] f32
    x_chunks = x_packed.reshape(BATCH, NCHUNK, GSUB).transpose(1, 0, 2)  # [NCHUNK, B, GSUB]

    out = wigner_kernel_forward(x_packed, x_chunks, cc_main, cc_last)
    out = jax.block_until_ready(out)                                  # [BATCH] f32
    out64 = np.asarray(out, dtype=np.float64)

    # (1) Tight structural check against a matched-precision (bf16-rounded
    #     inputs, high-precision accumulation) numpy model of the same algorithm.
    matched = _matched_reference(x_packed, cc_main, cc_last)
    np.testing.assert_allclose(out64, matched, rtol=1e-2,
                               atol=2e-3 * np.max(np.abs(matched)) + 1e-6)

    # (2) Loose semantic check against the torch-style per-(l1,l2,lambda) f64
    #     reference (bf16 coefficient rounding compounds over three combines).
    X_np = {l: np.asarray(X_dict[l], dtype=np.float64) for l in range(NL)}
    ref = _reference_forward(X_np, C)
    np.testing.assert_allclose(out64, ref, rtol=1e-1,
                               atol=5e-2 * np.max(np.abs(ref)) + 1e-6)

    print("KERNEL_OK")
</pallas_src>

<mosaic_0001>
module attributes {stable_mosaic.version = 11 : i64} {
  func.func @_fused_wigner_kernel(%arg0: i32, %arg1: memref<16x80xf32, #tpu.memory_space<vmem>>, %arg2: memref<2x16x8xf32, #tpu.memory_space<vmem>>, %arg3: memref<2x80x1024xbf16, #tpu.memory_space<vmem>>, %arg4: memref<80x128xbf16, #tpu.memory_space<vmem>>, %arg5: memref<16x1xf32, #tpu.memory_space<vmem>>, %arg6: memref<10x16x1024xf32, #tpu.memory_space<vmem>>, %arg7: memref<16x128xf32, #tpu.memory_space<vmem>>, %arg8: memref<16x128xf32, #tpu.memory_space<vmem>>, %arg9: memref<10x16x8xf32, #tpu.memory_space<vmem>>) attributes {dimension_semantics = [#tpu.dimension_semantics<arbitrary>], iteration_bounds = array<i64: 5>, scalar_prefetch = 0 : i64, scratch_operands = 4 : i64, tpu.core_type = #tpu.core_type<tc>, window_params = [{pipeline_mode = #tpu.pipeline_mode<synchronous>, transform_indices = @transform_0, window_bounds = array<i64: 16, 80>}, {transform_indices = @transform_1, window_bounds = array<i64: 2, 16, 8>}, {transform_indices = @transform_2, window_bounds = array<i64: 2, 80, 1024>}, {pipeline_mode = #tpu.pipeline_mode<synchronous>, transform_indices = @transform_3, window_bounds = array<i64: 80, 128>}, {pipeline_mode = #tpu.pipeline_mode<synchronous>, transform_indices = @transform_4, window_bounds = array<i64: 16, 1>}]} {
    %c0 = arith.constant 0 : index
    %c0_0 = arith.constant 0 : index
    %0 = vector.load %arg1[%c0, %c0_0] : memref<16x80xf32, #tpu.memory_space<vmem>>, vector<16x80xf32>
    %1 = arith.truncf %0 : vector<16x80xf32> to vector<16x80xbf16>
    %c0_i32 = arith.constant 0 : i32
    %2 = arith.cmpi eq, %arg0, %c0_i32 : i32
    %3 = arith.extui %2 : i1 to i32
    %c0_i32_1 = arith.constant 0 : i32
    %4 = arith.cmpi ne, %3, %c0_i32_1 : i32
    scf.if %4 {
      %cst_25 = arith.constant 0.000000e+00 : f32
      %112 = vector.broadcast %cst_25 : f32 to vector<16x128xf32>
      %c0_26 = arith.constant 0 : index
      %c0_27 = arith.constant 0 : index
      %113 = vector.load %arg7[%c0_26, %c0_27] : memref<16x128xf32, #tpu.memory_space<vmem>>, vector<16x128xf32>
      tpu.vector_store %arg7[%c0_26, %c0_27], %112 {strides = array<i32>} : memref<16x128xf32, #tpu.memory_space<vmem>>, vector<16x128xf32>,
      %c0_28 = arith.constant 0 : index
      %c0_29 = arith.constant 0 : index
      %114 = vector.load %arg4[%c0_28, %c0_29] : memref<80x128xbf16, #tpu.memory_space<vmem>>, vector<80x128xbf16>
      %cst_30 = arith.constant dense<0.000000e+00> : vector<16x128xf32>
      %115 = tpu.matmul %1, %114, %cst_30 {dimension_numbers = #tpu.dot_dimension_numbers<[1], [0], [0], [1], [0, 0, 1, 1], [], []>} : vector<16x80xbf16>, vector<80x128xbf16>, vector<16x128xf32> -> vector<16x128xf32>
      %c0_31 = arith.constant 0 : index
      %c0_32 = arith.constant 0 : index
      %116 = vector.load %arg8[%c0_31, %c0_32] : memref<16x128xf32, #tpu.memory_space<vmem>>, vector<16x128xf32>
      tpu.vector_store %arg8[%c0_31, %c0_32], %115 {strides = array<i32>} : memref<16x128xf32, #tpu.memory_space<vmem>>, vector<16x128xf32>,
    } else {
    }
    %c0_2 = arith.constant 0 : index
    %c0_3 = arith.constant 0 : index
    %5 = vector.load %arg7[%c0_2, %c0_3] : memref<16x128xf32, #tpu.memory_space<vmem>>, vector<16x128xf32>
    %c2_i32 = arith.constant 2 : i32
    %6 = arith.muli %arg0, %c2_i32 : i32
    %c0_i32_4 = arith.constant 0 : i32
    %7 = arith.addi %6, %c0_i32_4 : i32
    %c0_5 = arith.constant 0 : index
    %c0_6 = arith.constant 0 : index
    %c0_7 = arith.constant 0 : index
    %8 = vector.load %arg3[%c0_5, %c0_6, %c0_7] : memref<2x80x1024xbf16, #tpu.memory_space<vmem>>, vector<1x80x1024xbf16>
    %9 = vector.shape_cast %8 : vector<1x80x1024xbf16> to vector<80x1024xbf16>
    %cst = arith.constant dense<0.000000e+00> : vector<16x1024xf32>
    %10 = tpu.matmul %1, %9, %cst {dimension_numbers = #tpu.dot_dimension_numbers<[1], [0], [0], [1], [0, 0, 1, 1], [], []>} : vector<16x80xbf16>, vector<80x1024xbf16>, vector<16x1024xf32> -> vector<16x1024xf32>
    %11 = arith.index_cast %7 : i32 to index
    %c0_8 = arith.constant 0 : index
    %c0_9 = arith.constant 0 : index
    %12 = vector.load %arg6[%11, %c0_8, %c0_9] : memref<10x16x1024xf32, #tpu.memory_space<vmem>>, vector<1x16x1024xf32>
    %13 = vector.shape_cast %12 : vector<1x16x1024xf32> to vector<16x1024xf32>
    %14 = vector.shape_cast %10 : vector<16x1024xf32> to vector<1x16x1024xf32>
    tpu.vector_store %arg6[%11, %c0_8, %c0_9], %14 {strides = array<i32>} : memref<10x16x1024xf32, #tpu.memory_space<vmem>>, vector<1x16x1024xf32>,
    %c0_10 = arith.constant 0 : index
    %c0_11 = arith.constant 0 : index
    %c0_12 = arith.constant 0 : index
    %15 = vector.load %arg2[%c0_10, %c0_11, %c0_12] : memref<2x16x8xf32, #tpu.memory_space<vmem>>, vector<1x16x8xf32>
    %16 = vector.shape_cast %15 : vector<1x16x8xf32> to vector<16x8xf32>
    %17 = vector.extract_strided_slice %16 {offsets = [0, 0], sizes = [16, 1], strides = [1, 1]} : vector<16x8xf32> to vector<16x1xf32>
    %18 = vector.extract_strided_slice %10 {offsets = [0, 0], sizes = [16, 128], strides = [1, 1]} : vector<16x1024xf32> to vector<16x128xf32>
    %19 = vector.broadcast %17 : vector<16x1xf32> to vector<16x128xf32>
    %20 = arith.mulf %19, %18 : vector<16x128xf32>
    %21 = arith.addf %5, %20 : vector<16x128xf32>
    %22 = vector.extract_strided_slice %16 {offsets = [0, 1], sizes = [16, 1], strides = [1, 1]} : vector<16x8xf32> to vector<16x1xf32>
    %23 = vector.extract_strided_slice %10 {offsets = [0, 128], sizes = [16, 128], strides = [1, 1]} : vector<16x1024xf32> to vector<16x128xf32>
    %24 = vector.broadcast %22 : vector<16x1xf32> to vector<16x128xf32>
    %25 = arith.mulf %24, %23 : vector<16x128xf32>
    %26 = arith.addf %21, %25 : vector<16x128xf32>
    %27 = vector.extract_strided_slice %16 {offsets = [0, 2], sizes = [16, 1], strides = [1, 1]} : vector<16x8xf32> to vector<16x1xf32>
    %28 = vector.extract_strided_slice %10 {offsets = [0, 256], sizes = [16, 128], strides = [1, 1]} : vector<16x1024xf32> to vector<16x128xf32>
    %29 = vector.broadcast %27 : vector<16x1xf32> to vector<16x128xf32>
    %30 = arith.mulf %29, %28 : vector<16x128xf32>
    %31 = arith.addf %26, %30 : vector<16x128xf32>
    %32 = vector.extract_strided_slice %16 {offsets = [0, 3], sizes = [16, 1], strides = [1, 1]} : vector<16x8xf32> to vector<16x1xf32>
    %33 = vector.extract_strided_slice %10 {offsets = [0, 384], sizes = [16, 128], strides = [1, 1]} : vector<16x1024xf32> to vector<16x128xf32>
    %34 = vector.broadcast %32 : vector<16x1xf32> to vector<16x128xf32>
    %35 = arith.mulf %34, %33 : vector<16x128xf32>
    %36 = arith.addf %31, %35 : vector<16x128xf32>
    %37 = vector.extract_strided_slice %16 {offsets = [0, 4], sizes = [16, 1], strides = [1, 1]} : vector<16x8xf32> to vector<16x1xf32>
    %38 = vector.extract_strided_slice %10 {offsets = [0, 512], sizes = [16, 128], strides = [1, 1]} : vector<16x1024xf32> to vector<16x128xf32>
    %39 = vector.broadcast %37 : vector<16x1xf32> to vector<16x128xf32>
    %40 = arith.mulf %39, %38 : vector<16x128xf32>
    %41 = arith.addf %36, %40 : vector<16x128xf32>
    %42 = vector.extract_strided_slice %16 {offsets = [0, 5], sizes = [16, 1], strides = [1, 1]} : vector<16x8xf32> to vector<16x1xf32>
    %43 = vector.extract_strided_slice %10 {offsets = [0, 640], sizes = [16, 128], strides = [1, 1]} : vector<16x1024xf32> to vector<16x128xf32>
    %44 = vector.broadcast %42 : vector<16x1xf32> to vector<16x128xf32>
    %45 = arith.mulf %44, %43 : vector<16x128xf32>
    %46 = arith.addf %41, %45 : vector<16x128xf32>
    %47 = vector.extract_strided_slice %16 {offsets = [0, 6], sizes = [16, 1], strides = [1, 1]} : vector<16x8xf32> to vector<16x1xf32>
    %48 = vector.extract_strided_slice %10 {offsets = [0, 768], sizes = [16, 128], strides = [1, 1]} : vector<16x1024xf32> to vector<16x128xf32>
    %49 = vector.broadcast %47 : vector<16x1xf32> to vector<16x128xf32>
    %50 = arith.mulf %49, %48 : vector<16x128xf32>
    %51 = arith.addf %46, %50 : vector<16x128xf32>
    %52 = vector.extract_strided_slice %16 {offsets = [0, 7], sizes = [16, 1], strides = [1, 1]} : vector<16x8xf32> to vector<16x1xf32>
    %53 = vector.extract_strided_slice %10 {offsets = [0, 896], sizes = [16, 128], strides = [1, 1]} : vector<16x1024xf32> to vector<16x128xf32>
    %54 = vector.broadcast %52 : vector<16x1xf32> to vector<16x128xf32>
    %55 = arith.mulf %54, %53 : vector<16x128xf32>
    %56 = arith.addf %51, %55 : vector<16x128xf32>
    %c2_i32_13 = arith.constant 2 : i32
    %57 = arith.muli %arg0, %c2_i32_13 : i32
    %c1_i32 = arith.constant 1 : i32
    %58 = arith.addi %57, %c1_i32 : i32
    %c1 = arith.constant 1 : index
    %c0_14 = arith.constant 0 : index
    %c0_15 = arith.constant 0 : index
    %59 = vector.load %arg3[%c1, %c0_14, %c0_15] : memref<2x80x1024xbf16, #tpu.memory_space<vmem>>, vector<1x80x1024xbf16>
    %60 = vector.shape_cast %59 : vector<1x80x1024xbf16> to vector<80x1024xbf16>
    %cst_16 = arith.constant dense<0.000000e+00> : vector<16x1024xf32>
    %61 = tpu.matmul %1, %60, %cst_16 {dimension_numbers = #tpu.dot_dimension_numbers<[1], [0], [0], [1], [0, 0, 1, 1], [], []>} : vector<16x80xbf16>, vector<80x1024xbf16>, vector<16x1024xf32> -> vector<16x1024xf32>
    %62 = arith.index_cast %58 : i32 to index
    %c0_17 = arith.constant 0 : index
    %c0_18 = arith.constant 0 : index
    %63 = vector.load %arg6[%62, %c0_17, %c0_18] : memref<10x16x1024xf32, #tpu.memory_space<vmem>>, vector<1x16x1024xf32>
    %64 = vector.shape_cast %63 : vector<1x16x1024xf32> to vector<16x1024xf32>
    %65 = vector.shape_cast %61 : vector<16x1024xf32> to vector<1x16x1024xf32>
    tpu.vector_store %arg6[%62, %c0_17, %c0_18], %65 {strides = array<i32>} : memref<10x16x1024xf32, #tpu.memory_space<vmem>>, vector<1x16x1024xf32>,
    %c1_19 = arith.constant 1 : index
    %c0_20 = arith.constant 0 : index
    %c0_21 = arith.constant 0 : index
    %66 = vector.load %arg2[%c1_19, %c0_20, %c0_21] : memref<2x16x8xf32, #tpu.memory_space<vmem>>, vector<1x16x8xf32>
    %67 = vector.shape_cast %66 : vector<1x16x8xf32> to vector<16x8xf32>
    %68 = vector.extract_strided_slice %67 {offsets = [0, 0], sizes = [16, 1], strides = [1, 1]} : vector<16x8xf32> to vector<16x1xf32>
    %69 = vector.extract_strided_slice %61 {offsets = [0, 0], sizes = [16, 128], strides = [1, 1]} : vector<16x1024xf32> to vector<16x128xf32>
    %70 = vector.broadcast %68 : vector<16x1xf32> to vector<16x128xf32>
    %71 = arith.mulf %70, %69 : vector<16x128xf32>
    %72 = arith.addf %56, %71 : vector<16x128xf32>
    %73 = vector.extract_strided_slice %67 {offsets = [0, 1], sizes = [16, 1], strides = [1, 1]} : vector<16x8xf32> to vector<16x1xf32>
    %74 = vector.extract_strided_slice %61 {offsets = [0, 128], sizes = [16, 128], strides = [1, 1]} : vector<16x1024xf32> to vector<16x128xf32>
    %75 = vector.broadcast %73 : vector<16x1xf32> to vector<16x128xf32>
    %76 = arith.mulf %75, %74 : vector<16x128xf32>
    %77 = arith.addf %72, %76 : vector<16x128xf32>
    %78 = vector.extract_strided_slice %67 {offsets = [0, 2], sizes = [16, 1], strides = [1, 1]} : vector<16x8xf32> to vector<16x1xf32>
    %79 = vector.extract_strided_slice %61 {offsets = [0, 256], sizes = [16, 128], strides = [1, 1]} : vector<16x1024xf32> to vector<16x128xf32>
    %80 = vector.broadcast %78 : vector<16x1xf32> to vector<16x128xf32>
    %81 = arith.mulf %80, %79 : vector<16x128xf32>
    %82 = arith.addf %77, %81 : vector<16x128xf32>
    %83 = vector.extract_strided_slice %67 {offsets = [0, 3], sizes = [16, 1], strides = [1, 1]} : vector<16x8xf32> to vector<16x1xf32>
    %84 = vector.extract_strided_slice %61 {offsets = [0, 384], sizes = [16, 128], strides = [1, 1]} : vector<16x1024xf32> to vector<16x128xf32>
    %85 = vector.broadcast %83 : vector<16x1xf32> to vector<16x128xf32>
    %86 = arith.mulf %85, %84 : vector<16x128xf32>
    %87 = arith.addf %82, %86 : vector<16x128xf32>
    %88 = vector.extract_strided_slice %67 {offsets = [0, 4], sizes = [16, 1], strides = [1, 1]} : vector<16x8xf32> to vector<16x1xf32>
    %89 = vector.extract_strided_slice %61 {offsets = [0, 512], sizes = [16, 128], strides = [1, 1]} : vector<16x1024xf32> to vector<16x128xf32>
    %90 = vector.broadcast %88 : vector<16x1xf32> to vector<16x128xf32>
    %91 = arith.mulf %90, %89 : vector<16x128xf32>
    %92 = arith.addf %87, %91 : vector<16x128xf32>
    %93 = vector.extract_strided_slice %67 {offsets = [0, 5], sizes = [16, 1], strides = [1, 1]} : vector<16x8xf32> to vector<16x1xf32>
    %94 = vector.extract_strided_slice %61 {offsets = [0, 640], sizes = [16, 128], strides = [1, 1]} : vector<16x1024xf32> to vector<16x128xf32>
    %95 = vector.broadcast %93 : vector<16x1xf32> to vector<16x128xf32>
    %96 = arith.mulf %95, %94 : vector<16x128xf32>
    %97 = arith.addf %92, %96 : vector<16x128xf32>
    %98 = vector.extract_strided_slice %67 {offsets = [0, 6], sizes = [16, 1], strides = [1, 1]} : vector<16x8xf32> to vector<16x1xf32>
    %99 = vector.extract_strided_slice %61 {offsets = [0, 768], sizes = [16, 128], strides = [1, 1]} : vector<16x1024xf32> to vector<16x128xf32>
    %100 = vector.broadcast %98 : vector<16x1xf32> to vector<16x128xf32>
    %101 = arith.mulf %100, %99 : vector<16x128xf32>
    %102 = arith.addf %97, %101 : vector<16x128xf32>
    %103 = vector.extract_strided_slice %67 {offsets = [0, 7], sizes = [16, 1], strides = [1, 1]} : vector<16x8xf32> to vector<16x1xf32>
    %104 = vector.extract_strided_slice %61 {offsets = [0, 896], sizes = [16, 128], strides = [1, 1]} : vector<16x1024xf32> to vector<16x128xf32>
    %105 = vector.broadcast %103 : vector<16x1xf32> to vector<16x128xf32>
    %106 = arith.mulf %105, %104 : vector<16x128xf32>
    %107 = arith.addf %102, %106 : vector<16x128xf32>
    %c0_22 = arith.constant 0 : index
    %c0_23 = arith.constant 0 : index
    %108 = vector.load %arg7[%c0_22, %c0_23] : memref<16x128xf32, #tpu.memory_space<vmem>>, vector<16x128xf32>
    tpu.vector_store %arg7[%c0_22, %c0_23], %107 {strides = array<i32>} : memref<16x128xf32, #tpu.memory_space<vmem>>, vector<16x128xf32>,
    %c4_i32 = arith.constant 4 : i32
    %109 = arith.cmpi eq, %arg0, %c4_i32 : i32
    %110 = arith.extui %109 : i1 to i32
    %c0_i32_24 = arith.constant 0 : i32
    %111 = arith.cmpi ne, %110, %c0_i32_24 : i32
    scf.if %111 {
      %c0_25 = arith.constant 0 : index
      %c0_26 = arith.constant 0 : index
      %112 = vector.load %arg7[%c0_25, %c0_26] : memref<16x128xf32, #tpu.memory_space<vmem>>, vector<16x128xf32>
      %113 = vector.extract_strided_slice %112 {offsets = [0, 0], sizes = [16, 8], strides = [1, 1]} : vector<16x128xf32> to vector<16x8xf32>
      %c0_27 = arith.constant 0 : index
      %c0_28 = arith.constant 0 : index
      %c0_29 = arith.constant 0 : index
      %114 = vector.load %arg9[%c0_27, %c0_28, %c0_29] : memref<10x16x8xf32, #tpu.memory_space<vmem>>, vector<1x16x8xf32>
      %115 = vector.shape_cast %114 : vector<1x16x8xf32> to vector<16x8xf32>
      %116 = vector.shape_cast %113 : vector<16x8xf32> to vector<1x16x8xf32>
      tpu.vector_store %arg9[%c0_27, %c0_28, %c0_29], %116 {strides = array<i32>} : memref<10x16x8xf32, #tpu.memory_space<vmem>>, vector<1x16x8xf32>,
      %117 = vector.extract_strided_slice %112 {offsets = [0, 8], sizes = [16, 8], strides = [1, 1]} : vector<16x128xf32> to vector<16x8xf32>
      %c1_30 = arith.constant 1 : index
      %c0_31 = arith.constant 0 : index
      %c0_32 = arith.constant 0 : index
      %118 = vector.load %arg9[%c1_30, %c0_31, %c0_32] : memref<10x16x8xf32, #tpu.memory_space<vmem>>, vector<1x16x8xf32>
      %119 = vector.shape_cast %118 : vector<1x16x8xf32> to vector<16x8xf32>
      %120 = vector.shape_cast %117 : vector<16x8xf32> to vector<1x16x8xf32>
      tpu.vector_store %arg9[%c1_30, %c0_31, %c0_32], %120 {strides = array<i32>} : memref<10x16x8xf32, #tpu.memory_space<vmem>>, vector<1x16x8xf32>,
      %121 = vector.extract_strided_slice %112 {offsets = [0, 16], sizes = [16, 8], strides = [1, 1]} : vector<16x128xf32> to vector<16x8xf32>
      %c2 = arith.constant 2 : index
      %c0_33 = arith.constant 0 : index
      %c0_34 = arith.constant 0 : index
      %122 = vector.load %arg9[%c2, %c0_33, %c0_34] : memref<10x16x8xf32, #tpu.memory_space<vmem>>, vector<1x16x8xf32>
      %123 = vector.shape_cast %122 : vector<1x16x8xf32> to vector<16x8xf32>
      %124 = vector.shape_cast %121 : vector<16x8xf32> to vector<1x16x8xf32>
      tpu.vector_store %arg9[%c2, %c0_33, %c0_34], %124 {strides = array<i32>} : memref<10x16x8xf32, #tpu.memory_space<vmem>>, vector<1x16x8xf32>,
      %125 = vector.extract_strided_slice %112 {offsets = [0, 24], sizes = [16, 8], strides = [1, 1]} : vector<16x128xf32> to vector<16x8xf32>
      %c3 = arith.constant 3 : index
      %c0_35 = arith.constant 0 : index
      %c0_36 = arith.constant 0 : index
      %126 = vector.load %arg9[%c3, %c0_35, %c0_36] : memref<10x16x8xf32, #tpu.memory_space<vmem>>, vector<1x16x8xf32>
      %127 = vector.shape_cast %126 : vector<1x16x8xf32> to vector<16x8xf32>
      %128 = vector.shape_cast %125 : vector<16x8xf32> to vector<1x16x8xf32>
      tpu.vector_store %arg9[%c3, %c0_35, %c0_36], %128 {strides = array<i32>} : memref<10x16x8xf32, #tpu.memory_space<vmem>>, vector<1x16x8xf32>,
      %129 = vector.extract_strided_slice %112 {offsets = [0, 32], sizes = [16, 8], strides = [1, 1]} : vector<16x128xf32> to vector<16x8xf32>
      %c4 = arith.constant 4 : index
      %c0_37 = arith.constant 0 : index
      %c0_38 = arith.constant 0 : index
      %130 = vector.load %arg9[%c4, %c0_37, %c0_38] : memref<10x16x8xf32, #tpu.memory_space<vmem>>, vector<1x16x8xf32>
      %131 = vector.shape_cast %130 : vector<1x16x8xf32> to vector<16x8xf32>
      %132 = vector.shape_cast %129 : vector<16x8xf32> to vector<1x16x8xf32>
      tpu.vector_store %arg9[%c4, %c0_37, %c0_38], %132 {strides = array<i32>} : memref<10x16x8xf32, #tpu.memory_space<vmem>>, vector<1x16x8xf32>,
      %133 = vector.extract_strided_slice %112 {offsets = [0, 40], sizes = [16, 8], strides = [1, 1]} : vector<16x128xf32> to vector<16x8xf32>
      %c5 = arith.constant 5 : index
      %c0_39 = arith.constant 0 : index
      %c0_40 = arith.constant 0 : index
      %134 = vector.load %arg9[%c5, %c0_39, %c0_40] : memref<10x16x8xf32, #tpu.memory_space<vmem>>, vector<1x16x8xf32>
      %135 = vector.shape_cast %134 : vector<1x16x8xf32> to vector<16x8xf32>
      %136 = vector.shape_cast %133 : vector<16x8xf32> to vector<1x16x8xf32>
      tpu.vector_store %arg9[%c5, %c0_39, %c0_40], %136 {strides = array<i32>} : memref<10x16x8xf32, #tpu.memory_space<vmem>>, vector<1x16x8xf32>,
      %137 = vector.extract_strided_slice %112 {offsets = [0, 48], sizes = [16, 8], strides = [1, 1]} : vector<16x128xf32> to vector<16x8xf32>
      %c6 = arith.constant 6 : index
      %c0_41 = arith.constant 0 : index
      %c0_42 = arith.constant 0 : index
      %138 = vector.load %arg9[%c6, %c0_41, %c0_42] : memref<10x16x8xf32, #tpu.memory_space<vmem>>, vector<1x16x8xf32>
      %139 = vector.shape_cast %138 : vector<1x16x8xf32> to vector<16x8xf32>
      %140 = vector.shape_cast %137 : vector<16x8xf32> to vector<1x16x8xf32>
      tpu.vector_store %arg9[%c6, %c0_41, %c0_42], %140 {strides = array<i32>} : memref<10x16x8xf32, #tpu.memory_space<vmem>>, vector<1x16x8xf32>,
      %141 = vector.extract_strided_slice %112 {offsets = [0, 56], sizes = [16, 8], strides = [1, 1]} : vector<16x128xf32> to vector<16x8xf32>
      %c7 = arith.constant 7 : index
      %c0_43 = arith.constant 0 : index
      %c0_44 = arith.constant 0 : index
      %142 = vector.load %arg9[%c7, %c0_43, %c0_44] : memref<10x16x8xf32, #tpu.memory_space<vmem>>, vector<1x16x8xf32>
      %143 = vector.shape_cast %142 : vector<1x16x8xf32> to vector<16x8xf32>
      %144 = vector.shape_cast %141 : vector<16x8xf32> to vector<1x16x8xf32>
      tpu.vector_store %arg9[%c7, %c0_43, %c0_44], %144 {strides = array<i32>} : memref<10x16x8xf32, #tpu.memory_space<vmem>>, vector<1x16x8xf32>,
      %145 = vector.extract_strided_slice %112 {offsets = [0, 64], sizes = [16, 8], strides = [1, 1]} : vector<16x128xf32> to vector<16x8xf32>
      %c8 = arith.constant 8 : index
      %c0_45 = arith.constant 0 : index
      %c0_46 = arith.constant 0 : index
      %146 = vector.load %arg9[%c8, %c0_45, %c0_46] : memref<10x16x8xf32, #tpu.memory_space<vmem>>, vector<1x16x8xf32>
      %147 = vector.shape_cast %146 : vector<1x16x8xf32> to vector<16x8xf32>
      %148 = vector.shape_cast %145 : vector<16x8xf32> to vector<1x16x8xf32>
      tpu.vector_store %arg9[%c8, %c0_45, %c0_46], %148 {strides = array<i32>} : memref<10x16x8xf32, #tpu.memory_space<vmem>>, vector<1x16x8xf32>,
      %149 = vector.extract_strided_slice %112 {offsets = [0, 72], sizes = [16, 8], strides = [1, 1]} : vector<16x128xf32> to vector<16x8xf32>
      %c9 = arith.constant 9 : index
      %c0_47 = arith.constant 0 : index
      %c0_48 = arith.constant 0 : index
      %150 = vector.load %arg9[%c9, %c0_47, %c0_48] : memref<10x16x8xf32, #tpu.memory_space<vmem>>, vector<1x16x8xf32>
      %151 = vector.shape_cast %150 : vector<1x16x8xf32> to vector<16x8xf32>
      %152 = vector.shape_cast %149 : vector<16x8xf32> to vector<1x16x8xf32>
      tpu.vector_store %arg9[%c9, %c0_47, %c0_48], %152 {strides = array<i32>} : memref<10x16x8xf32, #tpu.memory_space<vmem>>, vector<1x16x8xf32>,
      %cst_49 = arith.constant 0.000000e+00 : f32
      %153 = vector.broadcast %cst_49 : f32 to vector<16x128xf32>
      %c0_i32_50 = arith.constant 0 : i32
      %c10_i32 = arith.constant 10 : i32
      %154 = arith.addi %c0_i32_50, %c10_i32 : i32
      %c1_i32_51 = arith.constant 1 : i32
      %155 = scf.for %arg10 = %c0_i32_50 to %154 step %c1_i32_51 iter_args(%arg11 = %153) -> (vector<16x128xf32>)  : i32 {
        %161 = arith.index_cast %arg10 : i32 to index
        %c0_58 = arith.constant 0 : index
        %c0_59 = arith.constant 0 : index
        %162 = vector.load %arg6[%161, %c0_58, %c0_59] : memref<10x16x1024xf32, #tpu.memory_space<vmem>>, vector<1x16x1024xf32>
        %163 = vector.shape_cast %162 : vector<1x16x1024xf32> to vector<16x1024xf32>
        %164 = arith.index_cast %arg10 : i32 to index
        %c0_60 = arith.constant 0 : index
        %c0_61 = arith.constant 0 : index
        %165 = vector.load %arg9[%164, %c0_60, %c0_61] : memref<10x16x8xf32, #tpu.memory_space<vmem>>, vector<1x16x8xf32>
        %166 = vector.shape_cast %165 : vector<1x16x8xf32> to vector<16x8xf32>
        %167 = vector.extract_strided_slice %166 {offsets = [0, 0], sizes = [16, 1], strides = [1, 1]} : vector<16x8xf32> to vector<16x1xf32>
        %168 = vector.extract_strided_slice %163 {offsets = [0, 0], sizes = [16, 128], strides = [1, 1]} : vector<16x1024xf32> to vector<16x128xf32>
        %169 = vector.broadcast %167 : vector<16x1xf32> to vector<16x128xf32>
        %170 = arith.mulf %169, %168 : vector<16x128xf32>
        %171 = arith.addf %arg11, %170 : vector<16x128xf32>
        %172 = vector.extract_strided_slice %166 {offsets = [0, 1], sizes = [16, 1], strides = [1, 1]} : vector<16x8xf32> to vector<16x1xf32>
        %173 = vector.extract_strided_slice %163 {offsets = [0, 128], sizes = [16, 128], strides = [1, 1]} : vector<16x1024xf32> to vector<16x128xf32>
        %174 = vector.broadcast %172 : vector<16x1xf32> to vector<16x128xf32>
        %175 = arith.mulf %174, %173 : vector<16x128xf32>
        %176 = arith.addf %171, %175 : vector<16x128xf32>
        %177 = vector.extract_strided_slice %166 {offsets = [0, 2], sizes = [16, 1], strides = [1, 1]} : vector<16x8xf32> to vector<16x1xf32>
        %178 = vector.extract_strided_slice %163 {offsets = [0, 256], sizes = [16, 128], strides = [1, 1]} : vector<16x1024xf32> to vector<16x128xf32>
        %179 = vector.broadcast %177 : vector<16x1xf32> to vector<16x128xf32>
        %180 = arith.mulf %179, %178 : vector<16x128xf32>
        %181 = arith.addf %176, %180 : vector<16x128xf32>
        %182 = vector.extract_strided_slice %166 {offsets = [0, 3], sizes = [16, 1], strides = [1, 1]} : vector<16x8xf32> to vector<16x1xf32>
        %183 = vector.extract_strided_slice %163 {offsets = [0, 384], sizes = [16, 128], strides = [1, 1]} : vector<16x1024xf32> to vector<16x128xf32>
        %184 = vector.broadcast %182 : vector<16x1xf32> to vector<16x128xf32>
        %185 = arith.mulf %184, %183 : vector<16x128xf32>
        %186 = arith.addf %181, %185 : vector<16x128xf32>
        %187 = vector.extract_strided_slice %166 {offsets = [0, 4], sizes = [16, 1], strides = [1, 1]} : vector<16x8xf32> to vector<16x1xf32>
        %188 = vector.extract_strided_slice %163 {offsets = [0, 512], sizes = [16, 128], strides = [1, 1]} : vector<16x1024xf32> to vector<16x128xf32>
        %189 = vector.broadcast %187 : vector<16x1xf32> to vector<16x128xf32>
        %190 = arith.mulf %189, %188 : vector<16x128xf32>
        %191 = arith.addf %186, %190 : vector<16x128xf32>
        %192 = vector.extract_strided_slice %166 {offsets = [0, 5], sizes = [16, 1], strides = [1, 1]} : vector<16x8xf32> to vector<16x1xf32>
        %193 = vector.extract_strided_slice %163 {offsets = [0, 640], sizes = [16, 128], strides = [1, 1]} : vector<16x1024xf32> to vector<16x128xf32>
        %194 = vector.broadcast %192 : vector<16x1xf32> to vector<16x128xf32>
        %195 = arith.mulf %194, %193 : vector<16x128xf32>
        %196 = arith.addf %191, %195 : vector<16x128xf32>
        %197 = vector.extract_strided_slice %166 {offsets = [0, 6], sizes = [16, 1], strides = [1, 1]} : vector<16x8xf32> to vector<16x1xf32>
        %198 = vector.extract_strided_slice %163 {offsets = [0, 768], sizes = [16, 128], strides = [1, 1]} : vector<16x1024xf32> to vector<16x128xf32>
        %199 = vector.broadcast %197 : vector<16x1xf32> to vector<16x128xf32>
        %200 = arith.mulf %199, %198 : vector<16x128xf32>
        %201 = arith.addf %196, %200 : vector<16x128xf32>
        %202 = vector.extract_strided_slice %166 {offsets = [0, 7], sizes = [16, 1], strides = [1, 1]} : vector<16x8xf32> to vector<16x1xf32>
        %203 = vector.extract_strided_slice %163 {offsets = [0, 896], sizes = [16, 128], strides = [1, 1]} : vector<16x1024xf32> to vector<16x128xf32>
        %204 = vector.broadcast %202 : vector<16x1xf32> to vector<16x128xf32>
        %205 = arith.mulf %204, %203 : vector<16x128xf32>
        %206 = arith.addf %201, %205 : vector<16x128xf32>
        scf.yield %206 : vector<16x128xf32>
      }
      %c10_i32_52 = arith.constant 10 : i32
      %c0_53 = arith.constant 0 : index
      %c0_54 = arith.constant 0 : index
      %156 = vector.load %arg8[%c0_53, %c0_54] : memref<16x128xf32, #tpu.memory_space<vmem>>, vector<16x128xf32>
      %157 = arith.mulf %155, %156 : vector<16x128xf32>
      %cst_55 = arith.constant dense<0.000000e+00> : vector<16xf32>
      %158 = vector.multi_reduction <add>, %157, %cst_55 [1] : vector<16x128xf32> to vector<16xf32>
      %159 = vector.shape_cast %158 : vector<16xf32> to vector<16x1xf32>
      %c0_56 = arith.constant 0 : index
      %c0_57 = arith.constant 0 : index
      %160 = vector.load %arg5[%c0_56, %c0_57] : memref<16x1xf32, #tpu.memory_space<vmem>>, vector<16x1xf32>
      tpu.vector_store %arg5[%c0_56, %c0_57], %159 {strides = array<i32>} : memref<16x1xf32, #tpu.memory_space<vmem>>, vector<16x1xf32>,
    } else {
    }
    return
  }
  func.func @transform_0(%arg0: i32) -> (i32, i32) {
    %c0_i32 = arith.constant 0 : i32
    %c0_i32_0 = arith.constant 0 : i32
    %c0_i32_1 = arith.constant 0 : i32
    return %c0_i32, %c0_i32_0 : i32, i32
  }
  func.func @transform_1(%arg0: i32) -> (i32, i32, i32) {
    %c0_i32 = arith.constant 0 : i32
    %c0_i32_0 = arith.constant 0 : i32
    %c0_i32_1 = arith.constant 0 : i32
    return %arg0, %c0_i32, %c0_i32_0 : i32, i32, i32
  }
  func.func @transform_2(%arg0: i32) -> (i32, i32, i32) {
    %c0_i32 = arith.constant 0 : i32
    %c0_i32_0 = arith.constant 0 : i32
    %c0_i32_1 = arith.constant 0 : i32
    return %arg0, %c0_i32, %c0_i32_0 : i32, i32, i32
  }
  func.func @transform_3(%arg0: i32) -> (i32, i32) {
    %c0_i32 = arith.constant 0 : i32
    %c0_i32_0 = arith.constant 0 : i32
    %c0_i32_1 = arith.constant 0 : i32
    return %c0_i32, %c0_i32_0 : i32, i32
  }
  func.func @transform_4(%arg0: i32) -> (i32, i32) {
    %c0_i32 = arith.constant 0 : i32
    %c0_i32_0 = arith.constant 0 : i32
    %c0_i32_1 = arith.constant 0 : i32
    return %c0_i32, %c0_i32_0 : i32, i32
  }
}

</mosaic_0001>

<llo_original>
// kernel: wigner_kernel_forward.1
$region0: #{wigner_kernel_forward.1}
  #allocation0 [shape = 'u32[]', space=smem, size = 0x4, offset = 0x4, fixed_abs, tag = 'smem constant byte address 0x4 - core index']
  #allocation1 [shape = 'u32[144,128]{1,0:T(1,128)}', space=vmem, size = 0x12000, scoped, tag = 'internal scratch']
  #allocation2 [shape = 'f32[10,16,1024]{2,1,0:T(8,128)}', space=vmem, size = 0xa0000, scoped, tag = 'scratch operand']
  #allocation3 [shape = 'f32[16,128]{1,0:T(8,128)}', space=vmem, size = 0x2000, scoped, tag = 'scratch operand']
  #allocation4 [shape = 'f32[16,128]{1,0:T(8,128)}', space=vmem, size = 0x2000, scoped, tag = 'scratch operand']
  #allocation5 [shape = 'f32[10,16,8]{2,1,0:T(8,128)}', space=vmem, size = 0x14000, scoped, tag = 'scratch operand']
  %s0 = inlined_call_operand.hbm [shape: f32[16,80], index: 0, kind: input, shape index: {}]
  %s1 = inlined_call_operand.vmem [shape: f32[10,16,8], index: 1, kind: input, shape index: {}]
  %s2 = inlined_call_operand.hbm [shape: bf16[10,80,1024], index: 2, kind: input, shape index: {}]
  %s3 = inlined_call_operand.hbm [shape: bf16[80,128], index: 3, kind: input, shape index: {}]
  %s4 = inlined_call_operand.vmem [shape: f32[16,1], index: 4, kind: output, shape index: {}]
  %s5 = sld [smem:[#allocation0]]
  $region76: #{wigner_kernel_forward.1} parent=0
    _
  %s7 = ssub.s32 1, %s5
  %s8 = scalar_select 0, %s7, %s5
  $region1: #{wigner_kernel_forward.1} parent=0
    #allocation6 [shape = 'u8[8192]{0}', space=vmem, size = 0x2000, scoped, tag = 'input window, operand 0, single buffered']
    #allocation7 [shape = 's32[2]{0}', space=sflag, size = 0x8, scoped, tag = 'scoped memory for wigner_kernel_forward.1']
    #allocation8 [shape = 'u8[655360]{0}', space=vmem, size = 0xa0000, scoped, tag = 'input window, operand 2']
    #allocation9 [shape = 's32[2]{0}', space=sflag, size = 0x8, scoped, tag = 'scoped memory for wigner_kernel_forward.1']
    #allocation10 [shape = 'u8[20480]{0}', space=vmem, size = 0x5000, scoped, tag = 'input window, operand 3, single buffered']
    %9 = vsyncpa [#allocation7], 0
    %10 = vsyncpa [#allocation9], 0
    %s11 = scalar_lea.sflag [#allocation9], 1
    %12 = vsyncpa %s11, 0
    loop: start=0, step=1, limit=7
    $region2: #{wigner_kernel_forward.1} parent=1 // loop_pre_header
      _
    $region3: #{wigner_kernel_forward.1} parent=1 // loop_header
      %s14 = sphi 0, %s18
      %p15 = scmp.ge.s32.totalorder %s14, 7
      %s22 = sphi 0, %s22
      %s24 = sphi 0, %s22
      %s25 = sphi 0, %s24
      %s39 = sphi 0, %s25
      %s45 = sphi 0, %s47
      %s48 = sphi 0, %s45
      %s49 = sphi 0, %s48
      %s65 = sphi 0, %s49
      %s71 = sphi 0, %s73
      %s74 = sphi 0, %s71
      %s75 = sphi 0, %s74
      %s91 = sphi 0, %s75
      %s95 = sphi 0, %s95
      %s97 = sphi 0, %s95
      %s98 = sphi 0, %s97
      %s112 = sphi 0, %s98
      %s116 = sphi 0, %s116
      %s118 = sphi 0, %s116
      %s119 = sphi 0, %s118
      %s133 = sphi 0, %s119
    $region4: #{wigner_kernel_forward.1} parent=1 // loop_header_branch
      %17 = sbr.rel (%p15) target = $region8
    $region5: #{wigner_kernel_forward.1} parent=1 // loop_body
      %s19 = ssub.s32 %s14, 1
      %s20 = ssub.s32 %s14, 2
      %s21 = sadd.s32 %s14, 1
      %s23 = sadd.s32 %s22, 1
      %p26 = scmp.eq.s32.totalorder %s14, 4
      %p27 = scmp.ne.s32.totalorder %s22, %s24
      %p28 = scmp.eq.s32.totalorder %s14, 0
      %p29 = por %p27, %p28
      %p30 = scmp.ne.s32.totalorder %s22, %s24
      %p31 = scmp.eq.s32.totalorder %s19, 4
      %p32 = por %p30, %p31
      %p33 = scmp.ne.s32.totalorder %s24, %s25
      %p34 = scmp.eq.s32.totalorder %s19, 0
      %p35 = por %p33, %p34
      %p36 = scmp.ne.s32.totalorder %s24, %s25
      %p37 = scmp.eq.s32.totalorder %s20, 4
      %p38 = por %p36, %p37
      %p40 = scmp.ne.s32.totalorder %s25, %s39
      %p41 = scmp.eq.s32.totalorder %s20, 0
      %p42 = por %p40, %p41
      %s43 = ssub.s32 %s14, %s21
      %p44 = scmp.eq.s32.totalorder %s43, 0
      %s46 = sadd.s32 %s45, 1
      %s47 = scalar_select %p44, %s45, %s46
      %p50 = pneg %p44
      %p51 = scmp.eq.s32.totalorder %s14, 4
      %p52 = por %p50, %p51
      %p53 = scmp.ne.s32.totalorder %s45, %s48
      %p54 = scmp.eq.s32.totalorder %s14, 0
      %p55 = por %p53, %p54
      %p56 = scmp.ne.s32.totalorder %s45, %s48
      %p57 = scmp.eq.s32.totalorder %s19, 4
      %p58 = por %p56, %p57
      %p59 = scmp.ne.s32.totalorder %s48, %s49
      %p60 = scmp.eq.s32.totalorder %s19, 0
      %p61 = por %p59, %p60
      %p62 = scmp.ne.s32.totalorder %s48, %s49
      %p63 = scmp.eq.s32.totalorder %s20, 4
      %p64 = por %p62, %p63
      %p66 = scmp.ne.s32.totalorder %s49, %s65
      %p67 = scmp.eq.s32.totalorder %s20, 0
      %p68 = por %p66, %p67
      %s69 = ssub.s32 %s14, %s21
      %p70 = scmp.eq.s32.totalorder %s69, 0
      %s72 = sadd.s32 %s71, 1
      %s73 = scalar_select %p70, %s71, %s72
      %p76 = pneg %p70
      %p77 = scmp.eq.s32.totalorder %s14, 4
      %p78 = por %p76, %p77
      %p79 = scmp.ne.s32.totalorder %s71, %s74
      %p80 = scmp.eq.s32.totalorder %s14, 0
      %p81 = por %p79, %p80
      %p82 = scmp.ne.s32.totalorder %s71, %s74
      %p83 = scmp.eq.s32.totalorder %s19, 4
      %p84 = por %p82, %p83
      %p85 = scmp.ne.s32.totalorder %s74, %s75
      %p86 = scmp.eq.s32.totalorder %s19, 0
      %p87 = por %p85, %p86
      %p88 = scmp.ne.s32.totalorder %s74, %s75
      %p89 = scmp.eq.s32.totalorder %s20, 4
      %p90 = por %p88, %p89
      %p92 = scmp.ne.s32.totalorder %s75, %s91
      %p93 = scmp.eq.s32.totalorder %s20, 0
      %p94 = por %p92, %p93
      %s96 = sadd.s32 %s95, 1
      %p99 = scmp.eq.s32.totalorder %s14, 4
      %p100 = scmp.ne.s32.totalorder %s95, %s97
      %p101 = scmp.eq.s32.totalorder %s14, 0
      %p102 = por %p100, %p101
      %p103 = scmp.ne.s32.totalorder %s95, %s97
      %p104 = scmp.eq.s32.totalorder %s19, 4
      %p105 = por %p103, %p104
      %p106 = scmp.ne.s32.totalorder %s97, %s98
      %p107 = scmp.eq.s32.totalorder %s19, 0
      %p108 = por %p106, %p107
      %p109 = scmp.ne.s32.totalorder %s97, %s98
      %p110 = scmp.eq.s32.totalorder %s20, 4
      %p111 = por %p109, %p110
      %p113 = scmp.ne.s32.totalorder %s98, %s112
      %p114 = scmp.eq.s32.totalorder %s20, 0
      %p115 = por %p113, %p114
      %s117 = sadd.s32 %s116, 1
      %p120 = scmp.eq.s32.totalorder %s14, 4
      %p121 = scmp.ne.s32.totalorder %s116, %s118
      %p122 = scmp.eq.s32.totalorder %s14, 0
      %p123 = por %p121, %p122
      %p124 = scmp.ne.s32.totalorder %s116, %s118
      %p125 = scmp.eq.s32.totalorder %s19, 4
      %p126 = por %p124, %p125
      %p127 = scmp.ne.s32.totalorder %s118, %s119
      %p128 = scmp.eq.s32.totalorder %s19, 0
      %p129 = por %p127, %p128
      %p130 = scmp.ne.s32.totalorder %s118, %s119
      %p131 = scmp.eq.s32.totalorder %s20, 4
      %p132 = por %p130, %p131
      %p134 = scmp.ne.s32.totalorder %s119, %s133
      %p135 = scmp.eq.s32.totalorder %s20, 0
      %p136 = por %p134, %p135
      %p137 = scmp.le.s32.totalorder 1, %s14
      %p138 = scmp.lt.s32.totalorder %s14, 6
      %p139 = pnand %p137, %p138
      %p140 = pneg %p139
      // Predicated region
      $region9: #{wigner_kernel_forward.1} parent=5 // pred_check
        _
      $region10: #{wigner_kernel_forward.1} parent=5 // pred_check_branch
        %142 = sbr.rel (%p139) target = $region12
      $region11: #{wigner_kernel_forward.1} parent=5 // pred_region
        %s143 = ssub.s32 %s14, 1
        // Predicated region
        $region13: #{wigner_kernel_forward.1} parent=11 // pred_check
          %p144 = pneg %p35
        $region14: #{wigner_kernel_forward.1} parent=11 // pred_check_branch
          %146 = sbr.rel (%p144) target = $region16
        $region15: #{wigner_kernel_forward.1} parent=11 // pred_region
          %s148 = ssub.s32 256, 256
          %149 = vsyncadd [#allocation7], %s148
          %s150 = sshll.u32 [#allocation6], 4
          %s151 = int_to_ptr.vmem [resolvable:$true] %s150
          %156 = dma.hbm_to_vmem [thread:$0]  %s0, 256, %s151, [#allocation7], 128, 128, 8
        $region16: #{wigner_kernel_forward.1} parent=11 // pred_fallthru
          _
        // Predicated region
        $region17: #{wigner_kernel_forward.1} parent=11 // pred_check
          %p157 = pneg %p108
        $region18: #{wigner_kernel_forward.1} parent=11 // pred_check_branch
          %159 = sbr.rel (%p157) target = $region20
        $region19: #{wigner_kernel_forward.1} parent=11 // pred_region
          %s161 = ssub.s32 640, 640
          %162 = vsyncadd [#allocation9], %s161
          %s163 = sshll.u32 [#allocation10], 4
          %s164 = int_to_ptr.vmem [resolvable:$true] %s163
          %169 = dma.hbm_to_vmem [thread:$0]  %s3, 640, %s164, [#allocation9], 64, 64, 4
        $region20: #{wigner_kernel_forward.1} parent=11 // pred_fallthru
          _
      $region12: #{wigner_kernel_forward.1} parent=5 // pred_fallthru
        _
      %p170 = scmp.lt.s32.totalorder %s14, 5
      // Predicated region
      $region21: #{wigner_kernel_forward.1} parent=5 // pred_check
        %p171 = pneg %p170
      $region22: #{wigner_kernel_forward.1} parent=5 // pred_check_branch
        %173 = sbr.rel (%p171) target = $region24
      $region23: #{wigner_kernel_forward.1} parent=5 // pred_region
        // Predicated region
        $region25: #{wigner_kernel_forward.1} parent=23 // pred_check
          %p174 = pneg %p55
        $region26: #{wigner_kernel_forward.1} parent=23 // pred_check_branch
          %176 = sbr.rel (%p174) target = $region28
        $region27: #{wigner_kernel_forward.1} parent=23 // pred_region
          %s177 = smul.u32 2, %s14
          %p178 = scmp.lt.s32.totalorder %s177, 9
          %s179 = scalar_select %p178, %s177, 9
          %s180 = smul.addr %s179, 2
          %s181 = smul.addr %s180, 8
          %s182 = scalar_lea.vmem %s1, %s181
          %s183 = smul.u32 2, %s14
        $region28: #{wigner_kernel_forward.1} parent=23 // pred_fallthru
          _
        // Predicated region
        $region29: #{wigner_kernel_forward.1} parent=23 // pred_check
          %p184 = pneg %p81
        $region30: #{wigner_kernel_forward.1} parent=23 // pred_check_branch
          %186 = sbr.rel (%p184) target = $region32
        $region31: #{wigner_kernel_forward.1} parent=23 // pred_region
          %s187 = sand.u32 %s14, 1
          %s188 = scalar_lea.sflag [#allocation9], %s187
          %s189 = sand.u32 %s71, 1
          %s190 = smul.addr %s189, 640
          %s191 = scalar_lea.vmem [#allocation8], %s190
          %s192 = smul.u32 2, %s14
          %s194 = ssub.s32 10240, 10240
          %195 = vsyncadd %s188, %s194
          %s196 = smul.addr %s192, 80
          %s197 = smul.addr %s196, 64
          %s198 = scalar_lea.hbm %s2, %s197
          %s199 = sshll.u32 %s191, 4
          %s200 = int_to_ptr.vmem [resolvable:$true] %s199
          %205 = dma.hbm_to_vmem [thread:$0]  %s198, 10240, %s200, %s188, 512, 512, 32
        $region32: #{wigner_kernel_forward.1} parent=23 // pred_fallthru
          _
      $region24: #{wigner_kernel_forward.1} parent=5 // pred_fallthru
        _
      %p206 = scmp.le.s32.totalorder 1, %s14
      %p207 = scmp.lt.s32.totalorder %s14, 6
      %p208 = pnand %p206, %p207
      %p209 = pneg %p208
      // Predicated region
      $region33: #{wigner_kernel_forward.1} parent=5 // pred_check
        _
      $region34: #{wigner_kernel_forward.1} parent=5 // pred_check_branch
        %211 = sbr.rel (%p208) target = $region36
      $region35: #{wigner_kernel_forward.1} parent=5 // pred_region
        %s212 = ssub.s32 %s14, 1
        // Predicated region
        $region37: #{wigner_kernel_forward.1} parent=35 // pred_check
          %p213 = pneg %p35
        $region38: #{wigner_kernel_forward.1} parent=35 // pred_check_branch
          %215 = sbr.rel (%p213) target = $region40
        $region39: #{wigner_kernel_forward.1} parent=35 // pred_region
          %216 = dma.done [#allocation7], 256
        $region40: #{wigner_kernel_forward.1} parent=35 // pred_fallthru
          _
        %s217 = sand.u32 %s19, 1
        %s218 = scalar_lea.sflag [#allocation9], %s217
        %s219 = sand.u32 %s74, 1
        %s220 = smul.addr %s219, 640
        %s221 = scalar_lea.vmem [#allocation8], %s220
        // Predicated region
        $region41: #{wigner_kernel_forward.1} parent=35 // pred_check
          %p222 = pneg %p87
        $region42: #{wigner_kernel_forward.1} parent=35 // pred_check_branch
          %224 = sbr.rel (%p222) target = $region44
        $region43: #{wigner_kernel_forward.1} parent=35 // pred_region
          %225 = dma.done %s218, 10240
        $region44: #{wigner_kernel_forward.1} parent=35 // pred_fallthru
          _
        // Predicated region
        $region45: #{wigner_kernel_forward.1} parent=35 // pred_check
          %p226 = pneg %p108
        $region46: #{wigner_kernel_forward.1} parent=35 // pred_check_branch
          %228 = sbr.rel (%p226) target = $region48
        $region47: #{wigner_kernel_forward.1} parent=35 // pred_region
          %229 = dma.done [#allocation9], 640
        $region48: #{wigner_kernel_forward.1} parent=35 // pred_fallthru
          _
        %p230 = pneg %p35
        %p231 = pneg %p32
        %s232 = smul.u32 2, %s19
        %p233 = scmp.lt.s32.totalorder %s232, 9
        %s234 = scalar_select %p233, %s232, 9
        %s235 = smul.addr %s234, 2
        %s236 = smul.addr %s235, 8
        %s237 = scalar_lea.vmem %s1, %s236
        %p238 = pneg %p61
        %p239 = pneg %p58
        %s240 = sand.u32 %s19, 1
        %s241 = scalar_lea.sflag [#allocation9], %s240
        %s242 = sand.u32 %s74, 1
        %s243 = smul.addr %s242, 640
        %s244 = scalar_lea.vmem [#allocation8], %s243
        %p245 = pneg %p87
        %p246 = pneg %p84
        %p247 = pneg %p108
        %p248 = pneg %p105
        %p249 = pneg %p129
        %p250 = pneg %p126
        %s251 = smul.u32 2, %s19
        %p252 = scmp.lt.s32.totalorder %s251, 9
        %s253 = scalar_select %p252, %s251, 9
        %s254 = smul.addr %s253, 2
        %s255 = smul.addr %s254, 8
        %s256 = scalar_lea.vmem %s1, %s255
        %s257 = smul.u32 2, %s19
        %s258 = smul.u32 2, %s19
        %v260 = vld [vmem:[#allocation6] sm:$0xff]
        %v261 = vld [vmem:[#allocation6 + $0x8] sm:$0xff]
        %v262 = vpack.c.bf16 %v261, %v260
        %p263 = scmp.eq.s32.totalorder %s19, 0
        // Predicated region
        $region49: #{wigner_kernel_forward.1} parent=35 // pred_check
          %p264 = pneg %p263
        $region50: #{wigner_kernel_forward.1} parent=35 // pred_check_branch
          %266 = sbr.rel (%p264) target = $region52
        $region51: #{wigner_kernel_forward.1} parent=35 // pred_region
          %267 = vst [vmem:[#allocation3] sm:$0xff] 0.0
          %268 = vst [vmem:[#allocation3 + $0x8] sm:$0xff] 0.0
          %v269 = vld [vmem:[#allocation10] sm:$0xf]
          %v270 = vld [vmem:[#allocation10 + $0x4] sm:$0xf]
          %v271 = vld [vmem:[#allocation10 + $0x8] sm:$0xf]
          %v272 = vld [vmem:[#allocation10 + $0xc] sm:$0xf]
          %v273 = vld [vmem:[#allocation10 + $0x10] sm:$0xf]
          %v274 = vld [vmem:[#allocation10 + $0x14] sm:$0xf]
          %v275 = vld [vmem:[#allocation10 + $0x18] sm:$0xf]
          %v276 = vld [vmem:[#allocation10 + $0x1c] sm:$0xf]
          %v277 = vld [vmem:[#allocation10 + $0x20] sm:$0xf]
          %v278 = vld [vmem:[#allocation10 + $0x24] sm:$0xf]
          %v289 = vunpack.c.l.b16 %v269
          %v290 = vunpack.c.l.b16 %v270
          %v291 = vunpack.c.l.b16 %v271
          %v292 = vunpack.c.l.b16 %v272
          %v293 = vunpack.c.l.b16 %v273
          %v294 = vunpack.c.l.b16 %v274
          %v295 = vunpack.c.l.b16 %v275
          %v296 = vunpack.c.l.b16 %v276
          %v297 = vunpack.c.l.b16 %v277
          %v298 = vunpack.c.l.b16 %v278
          %v299 = vpack.c.b16 %v290, %v289
          %v300 = vpack.c.b16 %v292, %v291
          %v301 = vpack.c.b16 %v294, %v293
          %v302 = vpack.c.b16 %v296, %v295
          %v303 = vpack.c.b16 %v298, %v297
          %vm309 = vcmask 654336
          %v311 = vsel %vm309, %v262, 0
          %313 = vmatprep.subr.bf16.mxu0 0
          %314 = vmatpush1.bf16.msra.mxu0 %v299
          %315 = vmatprep.subr.bf16.mxu0 0
          %316 = vmatpush1.bf16.msra.mxu0 %v300
          %317 = vmatprep.subr.bf16.mxu0 0
          %318 = vmatpush1.bf16.msra.mxu0 %v301
          %319 = vmatprep.subr.bf16.mxu0 0
          %320 = vmatpush1.bf16.msra.mxu0 %v302
          %321 = vmatprep.subr.bf16.mxu0 0
          %322 = vmatpush1.bf16.msra.mxu0 %v303
          %323 = vmatprep.subr.bf16.mxu0 0
          %324 = vmatpush1.bf16.msra.mxu0 0
          %325 = vmatprep.subr.bf16.mxu0 0
          %326 = vmatpush1.bf16.msra.mxu0 0
          %327 = vmatprep.subr.bf16.mxu0 0
          %328 = vmatpush1.bf16.msra.mxu0 0
          %329 = vmatprep.subr.bf16.mxu0 0
          %330 = vmatpush1.bf16.msra.mxu0 0
          %331 = vmatprep.subr.bf16.mxu0 0
          %332 = vmatpush1.bf16.msra.mxu0 0
          %333 = vmatprep.subr.bf16.mxu0 0
          %334 = vmatpush1.bf16.msra.mxu0 0
          %335 = vmatprep.subr.bf16.mxu0 0
          %336 = vmatpush1.bf16.msra.mxu0 0
          %337 = vmatprep.subr.bf16.mxu0 0
          %338 = vmatpush1.bf16.msra.mxu0 0
          %339 = vmatprep.subr.bf16.mxu0 0
          %340 = vmatpush1.bf16.msra.mxu0 0
          %341 = vmatprep.subr.bf16.mxu0 0
          %342 = vmatpush1.bf16.msra.mxu0 0
          %343 = vmatprep.subr.bf16.mxu0 0
          %344 = vmatpush1.bf16.msra.mxu0 0
          %345 = vmatprep.mubr.bf16.mxu0 0
          %346 = vmatmul.mubr.bf16.gmra.mrb[0].mxu0 %v311
          %v347 = vpop.f32.mrb[0].mxu0
          %v348 = vadd.f32 0.0, %v347
          %v349 = vpop.f32.mrb[0].mxu0
          %v350 = vpop.f32.mrb[0].mxu0
          %v351 = vadd.f32 0.0, %v350
          %v352 = vpop.f32.mrb[0].mxu0
          %353 = vdwg.mxu0
          %354 = vst [vmem:[#allocation4] sm:$0xff] %v348
          %355 = vst [vmem:[#allocation4 + $0x8] sm:$0xff] %v351
        $region52: #{wigner_kernel_forward.1} parent=35 // pred_fallthru
          _
        %v356 = vld [vmem:[#allocation3] sm:$0xff]
        %v357 = vld [vmem:[#allocation3 + $0x8] sm:$0xff]
        %s358 = smul.u32 %s19, 2
        %v359 = vld [vmem:[%s221] sm:$0xff]
        %v360 = vld [vmem:[%s221 + $0x8] sm:$0xff]
        %v361 = vld [vmem:[%s221 + $0x10] sm:$0xff]
        %v362 = vld [vmem:[%s221 + $0x18] sm:$0xff]
        %v363 = vld [vmem:[%s221 + $0x20] sm:$0xff]
        %v364 = vld [vmem:[%s221 + $0x28] sm:$0xff]
        %v365 = vld [vmem:[%s221 + $0x30] sm:$0xff]
        %v366 = vld [vmem:[%s221 + $0x38] sm:$0xff]
        %v367 = vld [vmem:[%s221 + $0x40] sm:$0xff]
        %v368 = vld [vmem:[%s221 + $0x48] sm:$0xff]
        %v369 = vld [vmem:[%s221 + $0x50] sm:$0xff]
        %v370 = vld [vmem:[%s221 + $0x58] sm:$0xff]
        %v371 = vld [vmem:[%s221 + $0x60] sm:$0xff]
        %v372 = vld [vmem:[%s221 + $0x68] sm:$0xff]
        %v373 = vld [vmem:[%s221 + $0x70] sm:$0xff]
        %v374 = vld [vmem:[%s221 + $0x78] sm:$0xff]
        %v375 = vld [vmem:[%s221 + $0x80] sm:$0xff]
        %v376 = vld [vmem:[%s221 + $0x88] sm:$0xff]
        %v377 = vld [vmem:[%s221 + $0x90] sm:$0xff]
        %v378 = vld [vmem:[%s221 + $0x98] sm:$0xff]
        %v379 = vld [vmem:[%s221 + $0xa0] sm:$0xff]
        %v380 = vld [vmem:[%s221 + $0xa8] sm:$0xff]
        %v381 = vld [vmem:[%s221 + $0xb0] sm:$0xff]
        %v382 = vld [vmem:[%s221 + $0xb8] sm:$0xff]
        %v383 = vld [vmem:[%s221 + $0xc0] sm:$0xff]
        %v384 = vld [vmem:[%s221 + $0xc8] sm:$0xff]
        %v385 = vld [vmem:[%s221 + $0xd0] sm:$0xff]
        %v386 = vld [vmem:[%s221 + $0xd8] sm:$0xff]
        %v387 = vld [vmem:[%s221 + $0xe0] sm:$0xff]
        %v388 = vld [vmem:[%s221 + $0xe8] sm:$0xff]
        %v389 = vld [vmem:[%s221 + $0xf0] sm:$0xff]
        %v390 = vld [vmem:[%s221 + $0xf8] sm:$0xff]
        %v391 = vld [vmem:[%s221 + $0x100] sm:$0xff]
        %v392 = vld [vmem:[%s221 + $0x108] sm:$0xff]
        %v393 = vld [vmem:[%s221 + $0x110] sm:$0xff]
        %v394 = vld [vmem:[%s221 + $0x118] sm:$0xff]
        %v395 = vld [vmem:[%s221 + $0x120] sm:$0xff]
        %v396 = vld [vmem:[%s221 + $0x128] sm:$0xff]
        %v397 = vld [vmem:[%s221 + $0x130] sm:$0xff]
        %v398 = vld [vmem:[%s221 + $0x138] sm:$0xff]
        %v439 = vunpack.c.l.b16 %v359
        %v440 = vunpack.c.h.b16 %v359
        %v441 = vunpack.c.l.b16 %v360
        %v442 = vunpack.c.h.b16 %v360
        %v443 = vunpack.c.l.b16 %v361
        %v444 = vunpack.c.h.b16 %v361
        %v445 = vunpack.c.l.b16 %v362
        %v446 = vunpack.c.h.b16 %v362
        %v447 = vunpack.c.l.b16 %v363
        %v448 = vunpack.c.h.b16 %v363
        %v449 = vunpack.c.l.b16 %v364
        %v450 = vunpack.c.h.b16 %v364
        %v451 = vunpack.c.l.b16 %v365
        %v452 = vunpack.c.h.b16 %v365
        %v453 = vunpack.c.l.b16 %v366
        %v454 = vunpack.c.h.b16 %v366
        %v455 = vunpack.c.l.b16 %v367
        %v456 = vunpack.c.h.b16 %v367
        %v457 = vunpack.c.l.b16 %v368
        %v458 = vunpack.c.h.b16 %v368
        %v459 = vunpack.c.l.b16 %v369
        %v460 = vunpack.c.h.b16 %v369
        %v461 = vunpack.c.l.b16 %v370
        %v462 = vunpack.c.h.b16 %v370
        %v463 = vunpack.c.l.b16 %v371
        %v464 = vunpack.c.h.b16 %v371
        %v465 = vunpack.c.l.b16 %v372
        %v466 = vunpack.c.h.b16 %v372
        %v467 = vunpack.c.l.b16 %v373
        %v468 = vunpack.c.h.b16 %v373
        %v469 = vunpack.c.l.b16 %v374
        %v470 = vunpack.c.h.b16 %v374
        %v471 = vunpack.c.l.b16 %v375
        %v472 = vunpack.c.h.b16 %v375
        %v473 = vunpack.c.l.b16 %v376
        %v474 = vunpack.c.h.b16 %v376
        %v475 = vunpack.c.l.b16 %v377
        %v476 = vunpack.c.h.b16 %v377
        %v477 = vunpack.c.l.b16 %v378
        %v478 = vunpack.c.h.b16 %v378
        %v479 = vunpack.c.l.b16 %v379
        %v480 = vunpack.c.h.b16 %v379
        %v481 = vunpack.c.l.b16 %v380
        %v482 = vunpack.c.h.b16 %v380
        %v483 = vunpack.c.l.b16 %v381
        %v484 = vunpack.c.h.b16 %v381
        %v485 = vunpack.c.l.b16 %v382
        %v486 = vunpack.c.h.b16 %v382
        %v487 = vunpack.c.l.b16 %v383
        %v488 = vunpack.c.h.b16 %v383
        %v489 = vunpack.c.l.b16 %v384
        %v490 = vunpack.c.h.b16 %v384
        %v491 = vunpack.c.l.b16 %v385
        %v492 = vunpack.c.h.b16 %v385
        %v493 = vunpack.c.l.b16 %v386
        %v494 = vunpack.c.h.b16 %v386
        %v495 = vunpack.c.l.b16 %v387
        %v496 = vunpack.c.h.b16 %v387
        %v497 = vunpack.c.l.b16 %v388
        %v498 = vunpack.c.h.b16 %v388
        %v499 = vunpack.c.l.b16 %v389
        %v500 = vunpack.c.h.b16 %v389
        %v501 = vunpack.c.l.b16 %v390
        %v502 = vunpack.c.h.b16 %v390
        %v503 = vunpack.c.l.b16 %v391
        %v504 = vunpack.c.h.b16 %v391
        %v505 = vunpack.c.l.b16 %v392
        %v506 = vunpack.c.h.b16 %v392
        %v507 = vunpack.c.l.b16 %v393
        %v508 = vunpack.c.h.b16 %v393
        %v509 = vunpack.c.l.b16 %v394
        %v510 = vunpack.c.h.b16 %v394
        %v511 = vunpack.c.l.b16 %v395
        %v512 = vunpack.c.h.b16 %v395
        %v513 = vunpack.c.l.b16 %v396
        %v514 = vunpack.c.h.b16 %v396
        %v515 = vunpack.c.l.b16 %v397
        %v516 = vunpack.c.h.b16 %v397
        %v517 = vunpack.c.l.b16 %v398
        %v518 = vunpack.c.h.b16 %v398
        %v519 = vpack.c.b16 %v447, %v439
        %v520 = vpack.c.b16 %v448, %v440
        %v521 = vpack.c.b16 %v449, %v441
        %v522 = vpack.c.b16 %v450, %v442
        %v523 = vpack.c.b16 %v451, %v443
        %v524 = vpack.c.b16 %v452, %v444
        %v525 = vpack.c.b16 %v453, %v445
        %v526 = vpack.c.b16 %v454, %v446
        %v527 = vpack.c.b16 %v463, %v455
        %v528 = vpack.c.b16 %v464, %v456
        %v529 = vpack.c.b16 %v465, %v457
        %v530 = vpack.c.b16 %v466, %v458
        %v531 = vpack.c.b16 %v467, %v459
        %v532 = vpack.c.b16 %v468, %v460
        %v533 = vpack.c.b16 %v469, %v461
        %v534 = vpack.c.b16 %v470, %v462
        %v535 = vpack.c.b16 %v479, %v471
        %v536 = vpack.c.b16 %v480, %v472
        %v537 = vpack.c.b16 %v481, %v473
        %v538 = vpack.c.b16 %v482, %v474
        %v539 = vpack.c.b16 %v483, %v475
        %v540 = vpack.c.b16 %v484, %v476
        %v541 = vpack.c.b16 %v485, %v477
        %v542 = vpack.c.b16 %v486, %v478
        %v543 = vpack.c.b16 %v495, %v487
        %v544 = vpack.c.b16 %v496, %v488
        %v545 = vpack.c.b16 %v497, %v489
        %v546 = vpack.c.b16 %v498, %v490
        %v547 = vpack.c.b16 %v499, %v491
        %v548 = vpack.c.b16 %v500, %v492
        %v549 = vpack.c.b16 %v501, %v493
        %v550 = vpack.c.b16 %v502, %v494
        %v551 = vpack.c.b16 %v511, %v503
        %v552 = vpack.c.b16 %v512, %v504
        %v553 = vpack.c.b16 %v513, %v505
        %v554 = vpack.c.b16 %v514, %v506
        %v555 = vpack.c.b16 %v515, %v507
        %v556 = vpack.c.b16 %v516, %v508
        %v557 = vpack.c.b16 %v517, %v509
        %v558 = vpack.c.b16 %v518, %v510
        %vm599 = vcmask 654336
        %v601 = vsel %vm599, %v262, 0
        %603 = vmatprep.subr.bf16.mxu0 %v520
        %604 = vmatpush1.bf16.msra.mxu0 %v519
        %605 = vmatprep.subr.bf16.mxu0 %v528
        %606 = vmatpush1.bf16.msra.mxu0 %v527
        %607 = vmatprep.subr.bf16.mxu0 %v536
        %608 = vmatpush1.bf16.msra.mxu0 %v535
        %609 = vmatprep.subr.bf16.mxu0 %v544
        %610 = vmatpush1.bf16.msra.mxu0 %v543
        %611 = vmatprep.subr.bf16.mxu0 %v552
        %612 = vmatpush1.bf16.msra.mxu0 %v551
        %613 = vmatprep.subr.bf16.mxu0 0
        %614 = vmatpush1.bf16.msra.mxu0 0
        %615 = vmatprep.subr.bf16.mxu0 0
        %616 = vmatpush1.bf16.msra.mxu0 0
        %617 = vmatprep.subr.bf16.mxu0 0
        %618 = vmatpush1.bf16.msra.mxu0 0
        %619 = vmatprep.subr.bf16.mxu0 0
        %620 = vmatpush1.bf16.msra.mxu0 0
        %621 = vmatprep.subr.bf16.mxu0 0
        %622 = vmatpush1.bf16.msra.mxu0 0
        %623 = vmatprep.subr.bf16.mxu0 0
        %624 = vmatpush1.bf16.msra.mxu0 0
        %625 = vmatprep.subr.bf16.mxu0 0
        %626 = vmatpush1.bf16.msra.mxu0 0
        %627 = vmatprep.subr.bf16.mxu0 0
        %628 = vmatpush1.bf16.msra.mxu0 0
        %629 = vmatprep.subr.bf16.mxu0 0
        %630 = vmatpush1.bf16.msra.mxu0 0
        %631 = vmatprep.subr.bf16.mxu0 0
        %632 = vmatpush1.bf16.msra.mxu0 0
        %633 = vmatprep.subr.bf16.mxu0 0
        %634 = vmatpush1.bf16.msra.mxu0 0
        %635 = vmatprep.mubr.bf16.mxu0 0
        %636 = vmatmul.mubr.bf16.gmra.mrb[0].mxu0 %v601
        %v637 = vpop.f32.mrb[0].mxu0
        %v638 = vadd.f32 0.0, %v637
        %v639 = vpop.f32.mrb[0].mxu0
        %v640 = vadd.f32 0.0, %v639
        %v641 = vpop.f32.mrb[0].mxu0
        %v642 = vadd.f32 0.0, %v641
        %v643 = vpop.f32.mrb[0].mxu0
        %v644 = vadd.f32 0.0, %v643
        %645 = vdwg.mxu0
        %646 = vmatprep.subr.bf16.mxu0 %v522
        %647 = vmatpush1.bf16.msra.mxu0 %v521
        %648 = vmatprep.subr.bf16.mxu0 %v530
        %649 = vmatpush1.bf16.msra.mxu0 %v529
        %650 = vmatprep.subr.bf16.mxu0 %v538
        %651 = vmatpush1.bf16.msra.mxu0 %v537
        %652 = vmatprep.subr.bf16.mxu0 %v546
        %653 = vmatpush1.bf16.msra.mxu0 %v545
        %654 = vmatprep.subr.bf16.mxu0 %v554
        %655 = vmatpush1.bf16.msra.mxu0 %v553
        %656 = vmatprep.subr.bf16.mxu0 0
        %657 = vmatpush1.bf16.msra.mxu0 0
        %658 = vmatprep.subr.bf16.mxu0 0
        %659 = vmatpush1.bf16.msra.mxu0 0
        %660 = vmatprep.subr.bf16.mxu0 0
        %661 = vmatpush1.bf16.msra.mxu0 0
        %662 = vmatprep.subr.bf16.mxu0 0
        %663 = vmatpush1.bf16.msra.mxu0 0
        %664 = vmatprep.subr.bf16.mxu0 0
        %665 = vmatpush1.bf16.msra.mxu0 0
        %666 = vmatprep.subr.bf16.mxu0 0
        %667 = vmatpush1.bf16.msra.mxu0 0
        %668 = vmatprep.subr.bf16.mxu0 0
        %669 = vmatpush1.bf16.msra.mxu0 0
        %670 = vmatprep.subr.bf16.mxu0 0
        %671 = vmatpush1.bf16.msra.mxu0 0
        %672 = vmatprep.subr.bf16.mxu0 0
        %673 = vmatpush1.bf16.msra.mxu0 0
        %674 = vmatprep.subr.bf16.mxu0 0
        %675 = vmatpush1.bf16.msra.mxu0 0
        %676 = vmatprep.subr.bf16.mxu0 0
        %677 = vmatpush1.bf16.msra.mxu0 0
        %678 = vmatprep.mubr.bf16.mxu0 0
        %679 = vmatmul.mubr.bf16.gmra.mrb[0].mxu0 %v601
        %v680 = vpop.f32.mrb[0].mxu0
        %v681 = vadd.f32 0.0, %v680
        %v682 = vpop.f32.mrb[0].mxu0
        %v683 = vadd.f32 0.0, %v682
        %v684 = vpop.f32.mrb[0].mxu0
        %v685 = vadd.f32 0.0, %v684
        %v686 = vpop.f32.mrb[0].mxu0
        %v687 = vadd.f32 0.0, %v686
        %688 = vdwg.mxu0
        %689 = vmatprep.subr.bf16.mxu0 %v524
        %690 = vmatpush1.bf16.msra.mxu0 %v523
        %691 = vmatprep.subr.bf16.mxu0 %v532
        %692 = vmatpush1.bf16.msra.mxu0 %v531
        %693 = vmatprep.subr.bf16.mxu0 %v540
        %694 = vmatpush1.bf16.msra.mxu0 %v539
        %695 = vmatprep.subr.bf16.mxu0 %v548
        %696 = vmatpush1.bf16.msra.mxu0 %v547
        %697 = vmatprep.subr.bf16.mxu0 %v556
        %698 = vmatpush1.bf16.msra.mxu0 %v555
        %699 = vmatprep.subr.bf16.mxu0 0
        %700 = vmatpush1.bf16.msra.mxu0 0
        %701 = vmatprep.subr.bf16.mxu0 0
        %702 = vmatpush1.bf16.msra.mxu0 0
        %703 = vmatprep.subr.bf16.mxu0 0
        %704 = vmatpush1.bf16.msra.mxu0 0
        %705 = vmatprep.subr.bf16.mxu0 0
        %706 = vmatpush1.bf16.msra.mxu0 0
        %707 = vmatprep.subr.bf16.mxu0 0
        %708 = vmatpush1.bf16.msra.mxu0 0
        %709 = vmatprep.subr.bf16.mxu0 0
        %710 = vmatpush1.bf16.msra.mxu0 0
        %711 = vmatprep.subr.bf16.mxu0 0
        %712 = vmatpush1.bf16.msra.mxu0 0
        %713 = vmatprep.subr.bf16.mxu0 0
        %714 = vmatpush1.bf16.msra.mxu0 0
        %715 = vmatprep.subr.bf16.mxu0 0
        %716 = vmatpush1.bf16.msra.mxu0 0
        %717 = vmatprep.subr.bf16.mxu0 0
        %718 = vmatpush1.bf16.msra.mxu0 0
        %719 = vmatprep.subr.bf16.mxu0 0
        %720 = vmatpush1.bf16.msra.mxu0 0
        %721 = vmatprep.mubr.bf16.mxu0 0
        %722 = vmatmul.mubr.bf16.gmra.mrb[0].mxu0 %v601
        %v723 = vpop.f32.mrb[0].mxu0
        %v724 = vadd.f32 0.0, %v723
        %v725 = vpop.f32.mrb[0].mxu0
        %v726 = vadd.f32 0.0, %v725
        %v727 = vpop.f32.mrb[0].mxu0
        %v728 = vadd.f32 0.0, %v727
        %v729 = vpop.f32.mrb[0].mxu0
        %v730 = vadd.f32 0.0, %v729
        %731 = vdwg.mxu0
        %732 = vmatprep.subr.bf16.mxu0 %v526
        %733 = vmatpush1.bf16.msra.mxu0 %v525
        %734 = vmatprep.subr.bf16.mxu0 %v534
        %735 = vmatpush1.bf16.msra.mxu0 %v533
        %736 = vmatprep.subr.bf16.mxu0 %v542
        %737 = vmatpush1.bf16.msra.mxu0 %v541
        %738 = vmatprep.subr.bf16.mxu0 %v550
        %739 = vmatpush1.bf16.msra.mxu0 %v549
        %740 = vmatprep.subr.bf16.mxu0 %v558
        %741 = vmatpush1.bf16.msra.mxu0 %v557
        %742 = vmatprep.subr.bf16.mxu0 0
        %743 = vmatpush1.bf16.msra.mxu0 0
        %744 = vmatprep.subr.bf16.mxu0 0
        %745 = vmatpush1.bf16.msra.mxu0 0
        %746 = vmatprep.subr.bf16.mxu0 0
        %747 = vmatpush1.bf16.msra.mxu0 0
        %748 = vmatprep.subr.bf16.mxu0 0
        %749 = vmatpush1.bf16.msra.mxu0 0
        %750 = vmatprep.subr.bf16.mxu0 0
        %751 = vmatpush1.bf16.msra.mxu0 0
        %752 = vmatprep.subr.bf16.mxu0 0
        %753 = vmatpush1.bf16.msra.mxu0 0
        %754 = vmatprep.subr.bf16.mxu0 0
        %755 = vmatpush1.bf16.msra.mxu0 0
        %756 = vmatprep.subr.bf16.mxu0 0
        %757 = vmatpush1.bf16.msra.mxu0 0
        %758 = vmatprep.subr.bf16.mxu0 0
        %759 = vmatpush1.bf16.msra.mxu0 0
        %760 = vmatprep.subr.bf16.mxu0 0
        %761 = vmatpush1.bf16.msra.mxu0 0
        %762 = vmatprep.subr.bf16.mxu0 0
        %763 = vmatpush1.bf16.msra.mxu0 0
        %764 = vmatprep.mubr.bf16.mxu0 0
        %765 = vmatmul.mubr.bf16.gmra.mrb[0].mxu0 %v601
        %v766 = vpop.f32.mrb[0].mxu0
        %v767 = vadd.f32 0.0, %v766
        %v768 = vpop.f32.mrb[0].mxu0
        %v769 = vadd.f32 0.0, %v768
        %v770 = vpop.f32.mrb[0].mxu0
        %v771 = vadd.f32 0.0, %v770
        %v772 = vpop.f32.mrb[0].mxu0
        %v773 = vadd.f32 0.0, %v772
        %774 = vdwg.mxu0
        %s775 = smul.u32 %s358, 16
        %s776 = smul.addr %s775, 8
        %s777 = scalar_lea.vmem [#allocation2], %s776
        %778 = vst [vmem:[%s777] sm:$0xff] %v638
        %779 = vst [vmem:[%s777 + $0x8] sm:$0xff] %v640
        %780 = vst [vmem:[%s777 + $0x10] sm:$0xff] %v681
        %781 = vst [vmem:[%s777 + $0x18] sm:$0xff] %v683
        %782 = vst [vmem:[%s777 + $0x20] sm:$0xff] %v724
        %783 = vst [vmem:[%s777 + $0x28] sm:$0xff] %v726
        %784 = vst [vmem:[%s777 + $0x30] sm:$0xff] %v767
        %785 = vst [vmem:[%s777 + $0x38] sm:$0xff] %v769
        %786 = vst [vmem:[%s777 + $0x40] sm:$0xff] %v642
        %787 = vst [vmem:[%s777 + $0x48] sm:$0xff] %v644
        %788 = vst [vmem:[%s777 + $0x50] sm:$0xff] %v685
        %789 = vst [vmem:[%s777 + $0x58] sm:$0xff] %v687
        %790 = vst [vmem:[%s777 + $0x60] sm:$0xff] %v728
        %791 = vst [vmem:[%s777 + $0x68] sm:$0xff] %v730
        %792 = vst [vmem:[%s777 + $0x70] sm:$0xff] %v771
        %793 = vst [vmem:[%s777 + $0x78] sm:$0xff] %v773
        %v794 = vld [vmem:[%s256] sm:$0xff]
        %v795 = vld [vmem:[%s256 + $0x8] sm:$0xff]
        %797 = vset.pattern.permute.xlu0 0
        %798 = vperm.xlu0 %797, %v794
        %v799 = vpop.permute.xlu0 %798
        %802 = vset.pattern.permute.xlu0 0
        %803 = vperm.xlu0 %802, %v795
        %v804 = vpop.permute.xlu0 %803
        %v806 = vmul.f32 %v799, %v638
        %v807 = vmul.f32 %v804, %v642
        %v808 = vadd.f32 %v356, %v806
        %v809 = vadd.f32 %v357, %v807
        %810 = vset.pattern.permute.xlu0 1
        %811 = vperm.xlu0 %810, %v794
        %v812 = vpop.permute.xlu0 %811
        %814 = vset.pattern.permute.xlu0 1
        %815 = vperm.xlu0 %814, %v795
        %v816 = vpop.permute.xlu0 %815
        %v818 = vmul.f32 %v812, %v640
        %v819 = vmul.f32 %v816, %v644
        %v820 = vadd.f32 %v808, %v818
        %v821 = vadd.f32 %v809, %v819
        %822 = vset.pattern.permute.xlu0 2
        %823 = vperm.xlu0 %822, %v794
        %v824 = vpop.permute.xlu0 %823
        %826 = vset.pattern.permute.xlu0 2
        %827 = vperm.xlu0 %826, %v795
        %v828 = vpop.permute.xlu0 %827
        %v830 = vmul.f32 %v824, %v681
        %v831 = vmul.f32 %v828, %v685
        %v832 = vadd.f32 %v820, %v830
        %v833 = vadd.f32 %v821, %v831
        %834 = vset.pattern.permute.xlu0 3
        %835 = vperm.xlu0 %834, %v794
        %v836 = vpop.permute.xlu0 %835
        %838 = vset.pattern.permute.xlu0 3
        %839 = vperm.xlu0 %838, %v795
        %v840 = vpop.permute.xlu0 %839
        %v842 = vmul.f32 %v836, %v683
        %v843 = vmul.f32 %v840, %v687
        %v844 = vadd.f32 %v832, %v842
        %v845 = vadd.f32 %v833, %v843
        %846 = vset.pattern.permute.xlu0 4
        %847 = vperm.xlu0 %846, %v794
        %v848 = vpop.permute.xlu0 %847
        %850 = vset.pattern.permute.xlu0 4
        %851 = vperm.xlu0 %850, %v795
        %v852 = vpop.permute.xlu0 %851
        %v854 = vmul.f32 %v848, %v724
        %v855 = vmul.f32 %v852, %v728
        %v856 = vadd.f32 %v844, %v854
        %v857 = vadd.f32 %v845, %v855
        %858 = vset.pattern.permute.xlu0 5
        %859 = vperm.xlu0 %858, %v794
        %v860 = vpop.permute.xlu0 %859
        %862 = vset.pattern.permute.xlu0 5
        %863 = vperm.xlu0 %862, %v795
        %v864 = vpop.permute.xlu0 %863
        %v866 = vmul.f32 %v860, %v726
        %v867 = vmul.f32 %v864, %v730
        %v868 = vadd.f32 %v856, %v866
        %v869 = vadd.f32 %v857, %v867
        %870 = vset.pattern.permute.xlu0 6
        %871 = vperm.xlu0 %870, %v794
        %v872 = vpop.permute.xlu0 %871
        %874 = vset.pattern.permute.xlu0 6
        %875 = vperm.xlu0 %874, %v795
        %v876 = vpop.permute.xlu0 %875
        %v878 = vmul.f32 %v872, %v767
        %v879 = vmul.f32 %v876, %v771
        %v880 = vadd.f32 %v868, %v878
        %v881 = vadd.f32 %v869, %v879
        %882 = vset.pattern.permute.xlu0 7
        %883 = vperm.xlu0 %882, %v794
        %v884 = vpop.permute.xlu0 %883
        %886 = vset.pattern.permute.xlu0 7
        %887 = vperm.xlu0 %886, %v795
        %v888 = vpop.permute.xlu0 %887
        %v890 = vmul.f32 %v884, %v769
        %v891 = vmul.f32 %v888, %v773
        %v892 = vadd.f32 %v880, %v890
        %v893 = vadd.f32 %v881, %v891
        %s894 = sadd.s32 %s358, 1
        %s895 = scalar_lea.vmem %s221, 320 [#allocation8]
        %v896 = vld [vmem:[%s895] sm:$0xff]
        %v897 = vld [vmem:[%s895 + $0x8] sm:$0xff]
        %v898 = vld [vmem:[%s895 + $0x10] sm:$0xff]
        %v899 = vld [vmem:[%s895 + $0x18] sm:$0xff]
        %v900 = vld [vmem:[%s895 + $0x20] sm:$0xff]
        %v901 = vld [vmem:[%s895 + $0x28] sm:$0xff]
        %v902 = vld [vmem:[%s895 + $0x30] sm:$0xff]
        %v903 = vld [vmem:[%s895 + $0x38] sm:$0xff]
        %v904 = vld [vmem:[%s895 + $0x40] sm:$0xff]
        %v905 = vld [vmem:[%s895 + $0x48] sm:$0xff]
        %v906 = vld [vmem:[%s895 + $0x50] sm:$0xff]
        %v907 = vld [vmem:[%s895 + $0x58] sm:$0xff]
        %v908 = vld [vmem:[%s895 + $0x60] sm:$0xff]
        %v909 = vld [vmem:[%s895 + $0x68] sm:$0xff]
        %v910 = vld [vmem:[%s895 + $0x70] sm:$0xff]
        %v911 = vld [vmem:[%s895 + $0x78] sm:$0xff]
        %v912 = vld [vmem:[%s895 + $0x80] sm:$0xff]
        %v913 = vld [vmem:[%s895 + $0x88] sm:$0xff]
        %v914 = vld [vmem:[%s895 + $0x90] sm:$0xff]
        %v915 = vld [vmem:[%s895 + $0x98] sm:$0xff]
        %v916 = vld [vmem:[%s895 + $0xa0] sm:$0xff]
        %v917 = vld [vmem:[%s895 + $0xa8] sm:$0xff]
        %v918 = vld [vmem:[%s895 + $0xb0] sm:$0xff]
        %v919 = vld [vmem:[%s895 + $0xb8] sm:$0xff]
        %v920 = vld [vmem:[%s895 + $0xc0] sm:$0xff]
        %v921 = vld [vmem:[%s895 + $0xc8] sm:$0xff]
        %v922 = vld [vmem:[%s895 + $0xd0] sm:$0xff]
        %v923 = vld [vmem:[%s895 + $0xd8] sm:$0xff]
        %v924 = vld [vmem:[%s895 + $0xe0] sm:$0xff]
        %v925 = vld [vmem:[%s895 + $0xe8] sm:$0xff]
        %v926 = vld [vmem:[%s895 + $0xf0] sm:$0xff]
        %v927 = vld [vmem:[%s895 + $0xf8] sm:$0xff]
        %v928 = vld [vmem:[%s895 + $0x100] sm:$0xff]
        %v929 = vld [vmem:[%s895 + $0x108] sm:$0xff]
        %v930 = vld [vmem:[%s895 + $0x110] sm:$0xff]
        %v931 = vld [vmem:[%s895 + $0x118] sm:$0xff]
        %v932 = vld [vmem:[%s895 + $0x120] sm:$0xff]
        %v933 = vld [vmem:[%s895 + $0x128] sm:$0xff]
        %v934 = vld [vmem:[%s895 + $0x130] sm:$0xff]
        %v935 = vld [vmem:[%s895 + $0x138] sm:$0xff]
        %v976 = vunpack.c.l.b16 %v896
        %v977 = vunpack.c.h.b16 %v896
        %v978 = vunpack.c.l.b16 %v897
        %v979 = vunpack.c.h.b16 %v897
        %v980 = vunpack.c.l.b16 %v898
        %v981 = vunpack.c.h.b16 %v898
        %v982 = vunpack.c.l.b16 %v899
        %v983 = vunpack.c.h.b16 %v899
        %v984 = vunpack.c.l.b16 %v900
        %v985 = vunpack.c.h.b16 %v900
        %v986 = vunpack.c.l.b16 %v901
        %v987 = vunpack.c.h.b16 %v901
        %v988 = vunpack.c.l.b16 %v902
        %v989 = vunpack.c.h.b16 %v902
        %v990 = vunpack.c.l.b16 %v903
        %v991 = vunpack.c.h.b16 %v903
        %v992 = vunpack.c.l.b16 %v904
        %v993 = vunpack.c.h.b16 %v904
        %v994 = vunpack.c.l.b16 %v905
        %v995 = vunpack.c.h.b16 %v905
        %v996 = vunpack.c.l.b16 %v906
        %v997 = vunpack.c.h.b16 %v906
        %v998 = vunpack.c.l.b16 %v907
        %v999 = vunpack.c.h.b16 %v907
        %v1000 = vunpack.c.l.b16 %v908
        %v1001 = vunpack.c.h.b16 %v908
        %v1002 = vunpack.c.l.b16 %v909
        %v1003 = vunpack.c.h.b16 %v909
        %v1004 = vunpack.c.l.b16 %v910
        %v1005 = vunpack.c.h.b16 %v910
        %v1006 = vunpack.c.l.b16 %v911
        %v1007 = vunpack.c.h.b16 %v911
        %v1008 = vunpack.c.l.b16 %v912
        %v1009 = vunpack.c.h.b16 %v912
        %v1010 = vunpack.c.l.b16 %v913
        %v1011 = vunpack.c.h.b16 %v913
        %v1012 = vunpack.c.l.b16 %v914
        %v1013 = vunpack.c.h.b16 %v914
        %v1014 = vunpack.c.l.b16 %v915
        %v1015 = vunpack.c.h.b16 %v915
        %v1016 = vunpack.c.l.b16 %v916
        %v1017 = vunpack.c.h.b16 %v916
        %v1018 = vunpack.c.l.b16 %v917
        %v1019 = vunpack.c.h.b16 %v917
        %v1020 = vunpack.c.l.b16 %v918
        %v1021 = vunpack.c.h.b16 %v918
        %v1022 = vunpack.c.l.b16 %v919
        %v1023 = vunpack.c.h.b16 %v919
        %v1024 = vunpack.c.l.b16 %v920
        %v1025 = vunpack.c.h.b16 %v920
        %v1026 = vunpack.c.l.b16 %v921
        %v1027 = vunpack.c.h.b16 %v921
        %v1028 = vunpack.c.l.b16 %v922
        %v1029 = vunpack.c.h.b16 %v922
        %v1030 = vunpack.c.l.b16 %v923
        %v1031 = vunpack.c.h.b16 %v923
        %v1032 = vunpack.c.l.b16 %v924
        %v1033 = vunpack.c.h.b16 %v924
        %v1034 = vunpack.c.l.b16 %v925
        %v1035 = vunpack.c.h.b16 %v925
        %v1036 = vunpack.c.l.b16 %v926
        %v1037 = vunpack.c.h.b16 %v926
        %v1038 = vunpack.c.l.b16 %v927
        %v1039 = vunpack.c.h.b16 %v927
        %v1040 = vunpack.c.l.b16 %v928
        %v1041 = vunpack.c.h.b16 %v928
        %v1042 = vunpack.c.l.b16 %v929
        %v1043 = vunpack.c.h.b16 %v929
        %v1044 = vunpack.c.l.b16 %v930
        %v1045 = vunpack.c.h.b16 %v930
        %v1046 = vunpack.c.l.b16 %v931
        %v1047 = vunpack.c.h.b16 %v931
        %v1048 = vunpack.c.l.b16 %v932
        %v1049 = vunpack.c.h.b16 %v932
        %v1050 = vunpack.c.l.b16 %v933
        %v1051 = vunpack.c.h.b16 %v933
        %v1052 = vunpack.c.l.b16 %v934
        %v1053 = vunpack.c.h.b16 %v934
        %v1054 = vunpack.c.l.b16 %v935
        %v1055 = vunpack.c.h.b16 %v935
        %v1056 = vpack.c.b16 %v984, %v976
        %v1057 = vpack.c.b16 %v985, %v977
        %v1058 = vpack.c.b16 %v986, %v978
        %v1059 = vpack.c.b16 %v987, %v979
        %v1060 = vpack.c.b16 %v988, %v980
        %v1061 = vpack.c.b16 %v989, %v981
        %v1062 = vpack.c.b16 %v990, %v982
        %v1063 = vpack.c.b16 %v991, %v983
        %v1064 = vpack.c.b16 %v1000, %v992
        %v1065 = vpack.c.b16 %v1001, %v993
        %v1066 = vpack.c.b16 %v1002, %v994
        %v1067 = vpack.c.b16 %v1003, %v995
        %v1068 = vpack.c.b16 %v1004, %v996
        %v1069 = vpack.c.b16 %v1005, %v997
        %v1070 = vpack.c.b16 %v1006, %v998
        %v1071 = vpack.c.b16 %v1007, %v999
        %v1072 = vpack.c.b16 %v1016, %v1008
        %v1073 = vpack.c.b16 %v1017, %v1009
        %v1074 = vpack.c.b16 %v1018, %v1010
        %v1075 = vpack.c.b16 %v1019, %v1011
        %v1076 = vpack.c.b16 %v1020, %v1012
        %v1077 = vpack.c.b16 %v1021, %v1013
        %v1078 = vpack.c.b16 %v1022, %v1014
        %v1079 = vpack.c.b16 %v1023, %v1015
        %v1080 = vpack.c.b16 %v1032, %v1024
        %v1081 = vpack.c.b16 %v1033, %v1025
        %v1082 = vpack.c.b16 %v1034, %v1026
        %v1083 = vpack.c.b16 %v1035, %v1027
        %v1084 = vpack.c.b16 %v1036, %v1028
        %v1085 = vpack.c.b16 %v1037, %v1029
        %v1086 = vpack.c.b16 %v1038, %v1030
        %v1087 = vpack.c.b16 %v1039, %v1031
        %v1088 = vpack.c.b16 %v1048, %v1040
        %v1089 = vpack.c.b16 %v1049, %v1041
        %v1090 = vpack.c.b16 %v1050, %v1042
        %v1091 = vpack.c.b16 %v1051, %v1043
        %v1092 = vpack.c.b16 %v1052, %v1044
        %v1093 = vpack.c.b16 %v1053, %v1045
        %v1094 = vpack.c.b16 %v1054, %v1046
        %v1095 = vpack.c.b16 %v1055, %v1047
        %1136 = vmatprep.subr.bf16.mxu0 %v1057
        %1137 = vmatpush1.bf16.msra.mxu0 %v1056
        %1138 = vmatprep.subr.bf16.mxu0 %v1065
        %1139 = vmatpush1.bf16.msra.mxu0 %v1064
        %1140 = vmatprep.subr.bf16.mxu0 %v1073
        %1141 = vmatpush1.bf16.msra.mxu0 %v1072
        %1142 = vmatprep.subr.bf16.mxu0 %v1081
        %1143 = vmatpush1.bf16.msra.mxu0 %v1080
        %1144 = vmatprep.subr.bf16.mxu0 %v1089
        %1145 = vmatpush1.bf16.msra.mxu0 %v1088
        %1146 = vmatprep.subr.bf16.mxu0 0
        %1147 = vmatpush1.bf16.msra.mxu0 0
        %1148 = vmatprep.subr.bf16.mxu0 0
        %1149 = vmatpush1.bf16.msra.mxu0 0
        %1150 = vmatprep.subr.bf16.mxu0 0
        %1151 = vmatpush1.bf16.msra.mxu0 0
        %1152 = vmatprep.subr.bf16.mxu0 0
        %1153 = vmatpush1.bf16.msra.mxu0 0
        %1154 = vmatprep.subr.bf16.mxu0 0
        %1155 = vmatpush1.bf16.msra.mxu0 0
        %1156 = vmatprep.subr.bf16.mxu0 0
        %1157 = vmatpush1.bf16.msra.mxu0 0
        %1158 = vmatprep.subr.bf16.mxu0 0
        %1159 = vmatpush1.bf16.msra.mxu0 0
        %1160 = vmatprep.subr.bf16.mxu0 0
        %1161 = vmatpush1.bf16.msra.mxu0 0
        %1162 = vmatprep.subr.bf16.mxu0 0
        %1163 = vmatpush1.bf16.msra.mxu0 0
        %1164 = vmatprep.subr.bf16.mxu0 0
        %1165 = vmatpush1.bf16.msra.mxu0 0
        %1166 = vmatprep.subr.bf16.mxu0 0
        %1167 = vmatpush1.bf16.msra.mxu0 0
        %1168 = vmatprep.mubr.bf16.mxu0 0
        %1169 = vmatmul.mubr.bf16.gmra.mrb[0].mxu0 %v601
        %v1170 = vpop.f32.mrb[0].mxu0
        %v1171 = vadd.f32 0.0, %v1170
        %v1172 = vpop.f32.mrb[0].mxu0
        %v1173 = vadd.f32 0.0, %v1172
        %v1174 = vpop.f32.mrb[0].mxu0
        %v1175 = vadd.f32 0.0, %v1174
        %v1176 = vpop.f32.mrb[0].mxu0
        %v1177 = vadd.f32 0.0, %v1176
        %1178 = vdwg.mxu0
        %1179 = vmatprep.subr.bf16.mxu0 %v1059
        %1180 = vmatpush1.bf16.msra.mxu0 %v1058
        %1181 = vmatprep.subr.bf16.mxu0 %v1067
        %1182 = vmatpush1.bf16.msra.mxu0 %v1066
        %1183 = vmatprep.subr.bf16.mxu0 %v1075
        %1184 = vmatpush1.bf16.msra.mxu0 %v1074
        %1185 = vmatprep.subr.bf16.mxu0 %v1083
        %1186 = vmatpush1.bf16.msra.mxu0 %v1082
        %1187 = vmatprep.subr.bf16.mxu0 %v1091
        %1188 = vmatpush1.bf16.msra.mxu0 %v1090
        %1189 = vmatprep.subr.bf16.mxu0 0
        %1190 = vmatpush1.bf16.msra.mxu0 0
        %1191 = vmatprep.subr.bf16.mxu0 0
        %1192 = vmatpush1.bf16.msra.mxu0 0
        %1193 = vmatprep.subr.bf16.mxu0 0
        %1194 = vmatpush1.bf16.msra.mxu0 0
        %1195 = vmatprep.subr.bf16.mxu0 0
        %1196 = vmatpush1.bf16.msra.mxu0 0
        %1197 = vmatprep.subr.bf16.mxu0 0
        %1198 = vmatpush1.bf16.msra.mxu0 0
        %1199 = vmatprep.subr.bf16.mxu0 0
        %1200 = vmatpush1.bf16.msra.mxu0 0
        %1201 = vmatprep.subr.bf16.mxu0 0
        %1202 = vmatpush1.bf16.msra.mxu0 0
        %1203 = vmatprep.subr.bf16.mxu0 0
        %1204 = vmatpush1.bf16.msra.mxu0 0
        %1205 = vmatprep.subr.bf16.mxu0 0
        %1206 = vmatpush1.bf16.msra.mxu0 0
        %1207 = vmatprep.subr.bf16.mxu0 0
        %1208 = vmatpush1.bf16.msra.mxu0 0
        %1209 = vmatprep.subr.bf16.mxu0 0
        %1210 = vmatpush1.bf16.msra.mxu0 0
        %1211 = vmatprep.mubr.bf16.mxu0 0
        %1212 = vmatmul.mubr.bf16.gmra.mrb[0].mxu0 %v601
        %v1213 = vpop.f32.mrb[0].mxu0
        %v1214 = vadd.f32 0.0, %v1213
        %v1215 = vpop.f32.mrb[0].mxu0
        %v1216 = vadd.f32 0.0, %v1215
        %v1217 = vpop.f32.mrb[0].mxu0
        %v1218 = vadd.f32 0.0, %v1217
        %v1219 = vpop.f32.mrb[0].mxu0
        %v1220 = vadd.f32 0.0, %v1219
        %1221 = vdwg.mxu0
        %1222 = vmatprep.subr.bf16.mxu0 %v1061
        %1223 = vmatpush1.bf16.msra.mxu0 %v1060
        %1224 = vmatprep.subr.bf16.mxu0 %v1069
        %1225 = vmatpush1.bf16.msra.mxu0 %v1068
        %1226 = vmatprep.subr.bf16.mxu0 %v1077
        %1227 = vmatpush1.bf16.msra.mxu0 %v1076
        %1228 = vmatprep.subr.bf16.mxu0 %v1085
        %1229 = vmatpush1.bf16.msra.mxu0 %v1084
        %1230 = vmatprep.subr.bf16.mxu0 %v1093
        %1231 = vmatpush1.bf16.msra.mxu0 %v1092
        %1232 = vmatprep.subr.bf16.mxu0 0
        %1233 = vmatpush1.bf16.msra.mxu0 0
        %1234 = vmatprep.subr.bf16.mxu0 0
        %1235 = vmatpush1.bf16.msra.mxu0 0
        %1236 = vmatprep.subr.bf16.mxu0 0
        %1237 = vmatpush1.bf16.msra.mxu0 0
        %1238 = vmatprep.subr.bf16.mxu0 0
        %1239 = vmatpush1.bf16.msra.mxu0 0
        %1240 = vmatprep.subr.bf16.mxu0 0
        %1241 = vmatpush1.bf16.msra.mxu0 0
        %1242 = vmatprep.subr.bf16.mxu0 0
        %1243 = vmatpush1.bf16.msra.mxu0 0
        %1244 = vmatprep.subr.bf16.mxu0 0
        %1245 = vmatpush1.bf16.msra.mxu0 0
        %1246 = vmatprep.subr.bf16.mxu0 0
        %1247 = vmatpush1.bf16.msra.mxu0 0
        %1248 = vmatprep.subr.bf16.mxu0 0
        %1249 = vmatpush1.bf16.msra.mxu0 0
        %1250 = vmatprep.subr.bf16.mxu0 0
        %1251 = vmatpush1.bf16.msra.mxu0 0
        %1252 = vmatprep.subr.bf16.mxu0 0
        %1253 = vmatpush1.bf16.msra.mxu0 0
        %1254 = vmatprep.mubr.bf16.mxu0 0
        %1255 = vmatmul.mubr.bf16.gmra.mrb[0].mxu0 %v601
        %v1256 = vpop.f32.mrb[0].mxu0
        %v1257 = vadd.f32 0.0, %v1256
        %v1258 = vpop.f32.mrb[0].mxu0
        %v1259 = vadd.f32 0.0, %v1258
        %v1260 = vpop.f32.mrb[0].mxu0
        %v1261 = vadd.f32 0.0, %v1260
        %v1262 = vpop.f32.mrb[0].mxu0
        %v1263 = vadd.f32 0.0, %v1262
        %1264 = vdwg.mxu0
        %1265 = vmatprep.subr.bf16.mxu0 %v1063
        %1266 = vmatpush1.bf16.msra.mxu0 %v1062
        %1267 = vmatprep.subr.bf16.mxu0 %v1071
        %1268 = vmatpush1.bf16.msra.mxu0 %v1070
        %1269 = vmatprep.subr.bf16.mxu0 %v1079
        %1270 = vmatpush1.bf16.msra.mxu0 %v1078
        %1271 = vmatprep.subr.bf16.mxu0 %v1087
        %1272 = vmatpush1.bf16.msra.mxu0 %v1086
        %1273 = vmatprep.subr.bf16.mxu0 %v1095
        %1274 = vmatpush1.bf16.msra.mxu0 %v1094
        %1275 = vmatprep.subr.bf16.mxu0 0
        %1276 = vmatpush1.bf16.msra.mxu0 0
        %1277 = vmatprep.subr.bf16.mxu0 0
        %1278 = vmatpush1.bf16.msra.mxu0 0
        %1279 = vmatprep.subr.bf16.mxu0 0
        %1280 = vmatpush1.bf16.msra.mxu0 0
        %1281 = vmatprep.subr.bf16.mxu0 0
        %1282 = vmatpush1.bf16.msra.mxu0 0
        %1283 = vmatprep.subr.bf16.mxu0 0
        %1284 = vmatpush1.bf16.msra.mxu0 0
        %1285 = vmatprep.subr.bf16.mxu0 0
        %1286 = vmatpush1.bf16.msra.mxu0 0
        %1287 = vmatprep.subr.bf16.mxu0 0
        %1288 = vmatpush1.bf16.msra.mxu0 0
        %1289 = vmatprep.subr.bf16.mxu0 0
        %1290 = vmatpush1.bf16.msra.mxu0 0
        %1291 = vmatprep.subr.bf16.mxu0 0
        %1292 = vmatpush1.bf16.msra.mxu0 0
        %1293 = vmatprep.subr.bf16.mxu0 0
        %1294 = vmatpush1.bf16.msra.mxu0 0
        %1295 = vmatprep.subr.bf16.mxu0 0
        %1296 = vmatpush1.bf16.msra.mxu0 0
        %1297 = vmatprep.mubr.bf16.mxu0 0
        %1298 = vmatmul.mubr.bf16.gmra.mrb[0].mxu0 %v601
        %v1299 = vpop.f32.mrb[0].mxu0
        %v1300 = vadd.f32 0.0, %v1299
        %v1301 = vpop.f32.mrb[0].mxu0
        %v1302 = vadd.f32 0.0, %v1301
        %v1303 = vpop.f32.mrb[0].mxu0
        %v1304 = vadd.f32 0.0, %v1303
        %v1305 = vpop.f32.mrb[0].mxu0
        %v1306 = vadd.f32 0.0, %v1305
        %1307 = vdwg.mxu0
        %s1308 = smul.u32 %s894, 16
        %s1309 = smul.addr %s1308, 8
        %s1310 = scalar_lea.vmem [#allocation2], %s1309
        %1311 = vst [vmem:[%s1310] sm:$0xff] %v1171
        %1312 = vst [vmem:[%s1310 + $0x8] sm:$0xff] %v1173
        %1313 = vst [vmem:[%s1310 + $0x10] sm:$0xff] %v1214
        %1314 = vst [vmem:[%s1310 + $0x18] sm:$0xff] %v1216
        %1315 = vst [vmem:[%s1310 + $0x20] sm:$0xff] %v1257
        %1316 = vst [vmem:[%s1310 + $0x28] sm:$0xff] %v1259
        %1317 = vst [vmem:[%s1310 + $0x30] sm:$0xff] %v1300
        %1318 = vst [vmem:[%s1310 + $0x38] sm:$0xff] %v1302
        %1319 = vst [vmem:[%s1310 + $0x40] sm:$0xff] %v1175
        %1320 = vst [vmem:[%s1310 + $0x48] sm:$0xff] %v1177
        %1321 = vst [vmem:[%s1310 + $0x50] sm:$0xff] %v1218
        %1322 = vst [vmem:[%s1310 + $0x58] sm:$0xff] %v1220
        %1323 = vst [vmem:[%s1310 + $0x60] sm:$0xff] %v1261
        %1324 = vst [vmem:[%s1310 + $0x68] sm:$0xff] %v1263
        %1325 = vst [vmem:[%s1310 + $0x70] sm:$0xff] %v1304
        %1326 = vst [vmem:[%s1310 + $0x78] sm:$0xff] %v1306
        %s1327 = scalar_lea.vmem %s256, 16
        %v1328 = vld [vmem:[%s1327] sm:$0xff]
        %v1329 = vld [vmem:[%s1327 + $0x8] sm:$0xff]
        %1331 = vset.pattern.permute.xlu0 0
        %1332 = vperm.xlu0 %1331, %v1328
        %v1333 = vpop.permute.xlu0 %1332
        %1336 = vset.pattern.permute.xlu0 0
        %1337 = vperm.xlu0 %1336, %v1329
        %v1338 = vpop.permute.xlu0 %1337
        %v1340 = vmul.f32 %v1333, %v1171
        %v1341 = vmul.f32 %v1338, %v1175
        %v1342 = vadd.f32 %v892, %v1340
        %v1343 = vadd.f32 %v893, %v1341
        %1344 = vset.pattern.permute.xlu0 1
        %1345 = vperm.xlu0 %1344, %v1328
        %v1346 = vpop.permute.xlu0 %1345
        %1348 = vset.pattern.permute.xlu0 1
        %1349 = vperm.xlu0 %1348, %v1329
        %v1350 = vpop.permute.xlu0 %1349
        %v1352 = vmul.f32 %v1346, %v1173
        %v1353 = vmul.f32 %v1350, %v1177
        %v1354 = vadd.f32 %v1342, %v1352
        %v1355 = vadd.f32 %v1343, %v1353
        %1356 = vset.pattern.permute.xlu0 2
        %1357 = vperm.xlu0 %1356, %v1328
        %v1358 = vpop.permute.xlu0 %1357
        %1360 = vset.pattern.permute.xlu0 2
        %1361 = vperm.xlu0 %1360, %v1329
        %v1362 = vpop.permute.xlu0 %1361
        %v1364 = vmul.f32 %v1358, %v1214
        %v1365 = vmul.f32 %v1362, %v1218
        %v1366 = vadd.f32 %v1354, %v1364
        %v1367 = vadd.f32 %v1355, %v1365
        %1368 = vset.pattern.permute.xlu0 3
        %1369 = vperm.xlu0 %1368, %v1328
        %v1370 = vpop.permute.xlu0 %1369
        %1372 = vset.pattern.permute.xlu0 3
        %1373 = vperm.xlu0 %1372, %v1329
        %v1374 = vpop.permute.xlu0 %1373
        %v1376 = vmul.f32 %v1370, %v1216
        %v1377 = vmul.f32 %v1374, %v1220
        %v1378 = vadd.f32 %v1366, %v1376
        %v1379 = vadd.f32 %v1367, %v1377
        %1380 = vset.pattern.permute.xlu0 4
        %1381 = vperm.xlu0 %1380, %v1328
        %v1382 = vpop.permute.xlu0 %1381
        %1384 = vset.pattern.permute.xlu0 4
        %1385 = vperm.xlu0 %1384, %v1329
        %v1386 = vpop.permute.xlu0 %1385
        %v1388 = vmul.f32 %v1382, %v1257
        %v1389 = vmul.f32 %v1386, %v1261
        %v1390 = vadd.f32 %v1378, %v1388
        %v1391 = vadd.f32 %v1379, %v1389
        %1392 = vset.pattern.permute.xlu0 5
        %1393 = vperm.xlu0 %1392, %v1328
        %v1394 = vpop.permute.xlu0 %1393
        %1396 = vset.pattern.permute.xlu0 5
        %1397 = vperm.xlu0 %1396, %v1329
        %v1398 = vpop.permute.xlu0 %1397
        %v1400 = vmul.f32 %v1394, %v1259
        %v1401 = vmul.f32 %v1398, %v1263
        %v1402 = vadd.f32 %v1390, %v1400
        %v1403 = vadd.f32 %v1391, %v1401
        %1404 = vset.pattern.permute.xlu0 6
        %1405 = vperm.xlu0 %1404, %v1328
        %v1406 = vpop.permute.xlu0 %1405
        %1408 = vset.pattern.permute.xlu0 6
        %1409 = vperm.xlu0 %1408, %v1329
        %v1410 = vpop.permute.xlu0 %1409
        %v1412 = vmul.f32 %v1406, %v1300
        %v1413 = vmul.f32 %v1410, %v1304
        %v1414 = vadd.f32 %v1402, %v1412
        %v1415 = vadd.f32 %v1403, %v1413
        %1416 = vset.pattern.permute.xlu0 7
        %1417 = vperm.xlu0 %1416, %v1328
        %v1418 = vpop.permute.xlu0 %1417
        %1420 = vset.pattern.permute.xlu0 7
        %1421 = vperm.xlu0 %1420, %v1329
        %v1422 = vpop.permute.xlu0 %1421
        %v1424 = vmul.f32 %v1418, %v1302
        %v1425 = vmul.f32 %v1422, %v1306
        %v1426 = vadd.f32 %v1414, %v1424
        %v1427 = vadd.f32 %v1415, %v1425
        %1428 = vst [vmem:[#allocation3] sm:$0xff] %v1426
        %1429 = vst [vmem:[#allocation3 + $0x8] sm:$0xff] %v1427
        %p1430 = scmp.eq.s32.totalorder %s19, 4
        // Predicated region
        $region53: #{wigner_kernel_forward.1} parent=35 // pred_check
          %p1431 = pneg %p1430
        $region54: #{wigner_kernel_forward.1} parent=35 // pred_check_branch
          %1433 = sbr.rel (%p1431) target = $region56
        $region55: #{wigner_kernel_forward.1} parent=35 // pred_region
          %v1434 = vld [vmem:[#allocation3] sm:$0xff]
          %v1435 = vld [vmem:[#allocation3 + $0x8] sm:$0xff]
          %vm1436 = vcmask 64512
          %1437 = vst.msk [vmem:[#allocation5] sm:$0xff] %vm1436, %v1434
          %1438 = vst.msk [vmem:[#allocation5 + $0x8] sm:$0xff] %vm1436, %v1435
          %1441 = vrot.lane.b32.xlu0 %v1434, 120
          %v1442 = vpop.permute.xlu0 %1441
          %1443 = vrot.lane.b32.xlu0 %v1435, 120
          %v1444 = vpop.permute.xlu0 %1443
          %s1447 = scalar_lea.vmem [#allocation5], 16
          %1448 = vst.msk [vmem:[%s1447] sm:$0xff] %vm1436, %v1442
          %1449 = vst.msk [vmem:[%s1447 + $0x8] sm:$0xff] %vm1436, %v1444
          %1450 = vrot.lane.b32.xlu0 %v1434, 112
          %v1451 = vpop.permute.xlu0 %1450
          %1452 = vrot.lane.b32.xlu0 %v1435, 112
          %v1453 = vpop.permute.xlu0 %1452
          %s1456 = scalar_lea.vmem [#allocation5], 32
          %1457 = vst.msk [vmem:[%s1456] sm:$0xff] %vm1436, %v1451
          %1458 = vst.msk [vmem:[%s1456 + $0x8] sm:$0xff] %vm1436, %v1453
          %1459 = vrot.lane.b32.xlu0 %v1434, 104
          %v1460 = vpop.permute.xlu0 %1459
          %1461 = vrot.lane.b32.xlu0 %v1435, 104
          %v1462 = vpop.permute.xlu0 %1461
          %s1465 = scalar_lea.vmem [#allocation5], 48
          %1466 = vst.msk [vmem:[%s1465] sm:$0xff] %vm1436, %v1460
          %1467 = vst.msk [vmem:[%s1465 + $0x8] sm:$0xff] %vm1436, %v1462
          %1468 = vrot.lane.b32.xlu0 %v1434, 96
          %v1469 = vpop.permute.xlu0 %1468
          %1470 = vrot.lane.b32.xlu0 %v1435, 96
          %v1471 = vpop.permute.xlu0 %1470
          %s1474 = scalar_lea.vmem [#allocation5], 64
          %1475 = vst.msk [vmem:[%s1474] sm:$0xff] %vm1436, %v1469
          %1476 = vst.msk [vmem:[%s1474 + $0x8] sm:$0xff] %vm1436, %v1471
          %1477 = vrot.lane.b32.xlu0 %v1434, 88
          %v1478 = vpop.permute.xlu0 %1477
          %1479 = vrot.lane.b32.xlu0 %v1435, 88
          %v1480 = vpop.permute.xlu0 %1479
          %s1483 = scalar_lea.vmem [#allocation5], 80
          %1484 = vst.msk [vmem:[%s1483] sm:$0xff] %vm1436, %v1478
          %1485 = vst.msk [vmem:[%s1483 + $0x8] sm:$0xff] %vm1436, %v1480
          %1486 = vrot.lane.b32.xlu0 %v1434, 80
          %v1487 = vpop.permute.xlu0 %1486
          %1488 = vrot.lane.b32.xlu0 %v1435, 80
          %v1489 = vpop.permute.xlu0 %1488
          %s1492 = scalar_lea.vmem [#allocation5], 96
          %1493 = vst.msk [vmem:[%s1492] sm:$0xff] %vm1436, %v1487
          %1494 = vst.msk [vmem:[%s1492 + $0x8] sm:$0xff] %vm1436, %v1489
          %1495 = vrot.lane.b32.xlu0 %v1434, 72
          %v1496 = vpop.permute.xlu0 %1495
          %1497 = vrot.lane.b32.xlu0 %v1435, 72
          %v1498 = vpop.permute.xlu0 %1497
          %s1501 = scalar_lea.vmem [#allocation5], 112
          %1502 = vst.msk [vmem:[%s1501] sm:$0xff] %vm1436, %v1496
          %1503 = vst.msk [vmem:[%s1501 + $0x8] sm:$0xff] %vm1436, %v1498
          %1504 = vrot.lane.b32.xlu0 %v1434, 64
          %v1505 = vpop.permute.xlu0 %1504
          %1506 = vrot.lane.b32.xlu0 %v1435, 64
          %v1507 = vpop.permute.xlu0 %1506
          %s1510 = scalar_lea.vmem [#allocation5], 128
          %1511 = vst.msk [vmem:[%s1510] sm:$0xff] %vm1436, %v1505
          %1512 = vst.msk [vmem:[%s1510 + $0x8] sm:$0xff] %vm1436, %v1507
          %1513 = vrot.lane.b32.xlu0 %v1434, 56
          %v1514 = vpop.permute.xlu0 %1513
          %1515 = vrot.lane.b32.xlu0 %v1435, 56
          %v1516 = vpop.permute.xlu0 %1515
          %s1519 = scalar_lea.vmem [#allocation5], 144
          %1520 = vst.msk [vmem:[%s1519] sm:$0xff] %vm1436, %v1514
          %1521 = vst.msk [vmem:[%s1519 + $0x8] sm:$0xff] %vm1436, %v1516
          loop: start=0, step=1, limit=10
          $region57: #{wigner_kernel_forward.1} parent=55 // loop_pre_header
            _
          $region58: #{wigner_kernel_forward.1} parent=55 // loop_header
            %s1523 = sphi 0, %s1527
            %p1524 = scmp.ge.s32.totalorder %s1523, 10
            %v1528 = vphi 0.0, %v1648
            %v1529 = vphi 0.0, %v1649
          $region59: #{wigner_kernel_forward.1} parent=55 // loop_header_branch
            %1526 = sbr.rel (%p1524) target = $region63
          $region60: #{wigner_kernel_forward.1} parent=55 // loop_body
            %s1530 = smul.u32 %s1523, 16
            %s1531 = smul.addr %s1530, 8
            %s1532 = scalar_lea.vmem [#allocation2], %s1531
            %v1533 = vld [vmem:[%s1532] sm:$0xff]
            %v1534 = vld [vmem:[%s1532 + $0x8] sm:$0xff]
            %v1535 = vld [vmem:[%s1532 + $0x10] sm:$0xff]
            %v1536 = vld [vmem:[%s1532 + $0x18] sm:$0xff]
            %v1537 = vld [vmem:[%s1532 + $0x20] sm:$0xff]
            %v1538 = vld [vmem:[%s1532 + $0x28] sm:$0xff]
            %v1539 = vld [vmem:[%s1532 + $0x30] sm:$0xff]
            %v1540 = vld [vmem:[%s1532 + $0x38] sm:$0xff]
            %v1541 = vld [vmem:[%s1532 + $0x40] sm:$0xff]
            %v1542 = vld [vmem:[%s1532 + $0x48] sm:$0xff]
            %v1543 = vld [vmem:[%s1532 + $0x50] sm:$0xff]
            %v1544 = vld [vmem:[%s1532 + $0x58] sm:$0xff]
            %v1545 = vld [vmem:[%s1532 + $0x60] sm:$0xff]
            %v1546 = vld [vmem:[%s1532 + $0x68] sm:$0xff]
            %v1547 = vld [vmem:[%s1532 + $0x70] sm:$0xff]
            %v1548 = vld [vmem:[%s1532 + $0x78] sm:$0xff]
            %s1549 = scalar_lea.vmem [#allocation5], %s1530
            %v1550 = vld [vmem:[%s1549] sm:$0xff]
            %v1551 = vld [vmem:[%s1549 + $0x8] sm:$0xff]
            %1553 = vset.pattern.permute.xlu0 0
            %1554 = vperm.xlu0 %1553, %v1550
            %v1555 = vpop.permute.xlu0 %1554
            %1558 = vset.pattern.permute.xlu0 0
            %1559 = vperm.xlu0 %1558, %v1551
            %v1560 = vpop.permute.xlu0 %1559
            %v1562 = vmul.f32 %v1555, %v1533
            %v1563 = vmul.f32 %v1560, %v1541
            %v1564 = vadd.f32 %v1528, %v1562
            %v1565 = vadd.f32 %v1529, %v1563
            %1566 = vset.pattern.permute.xlu0 1
            %1567 = vperm.xlu0 %1566, %v1550
            %v1568 = vpop.permute.xlu0 %1567
            %1570 = vset.pattern.permute.xlu0 1
            %1571 = vperm.xlu0 %1570, %v1551
            %v1572 = vpop.permute.xlu0 %1571
            %v1574 = vmul.f32 %v1568, %v1534
            %v1575 = vmul.f32 %v1572, %v1542
            %v1576 = vadd.f32 %v1564, %v1574
            %v1577 = vadd.f32 %v1565, %v1575
            %1578 = vset.pattern.permute.xlu0 2
            %1579 = vperm.xlu0 %1578, %v1550
            %v1580 = vpop.permute.xlu0 %1579
            %1582 = vset.pattern.permute.xlu0 2
            %1583 = vperm.xlu0 %1582, %v1551
            %v1584 = vpop.permute.xlu0 %1583
            %v1586 = vmul.f32 %v1580, %v1535
            %v1587 = vmul.f32 %v1584, %v1543
            %v1588 = vadd.f32 %v1576, %v1586
            %v1589 = vadd.f32 %v1577, %v1587
            %1590 = vset.pattern.permute.xlu0 3
            %1591 = vperm.xlu0 %1590, %v1550
            %v1592 = vpop.permute.xlu0 %1591
            %1594 = vset.pattern.permute.xlu0 3
            %1595 = vperm.xlu0 %1594, %v1551
            %v1596 = vpop.permute.xlu0 %1595
            %v1598 = vmul.f32 %v1592, %v1536
            %v1599 = vmul.f32 %v1596, %v1544
            %v1600 = vadd.f32 %v1588, %v1598
            %v1601 = vadd.f32 %v1589, %v1599
            %1602 = vset.pattern.permute.xlu0 4
            %1603 = vperm.xlu0 %1602, %v1550
            %v1604 = vpop.permute.xlu0 %1603
            %1606 = vset.pattern.permute.xlu0 4
            %1607 = vperm.xlu0 %1606, %v1551
            %v1608 = vpop.permute.xlu0 %1607
            %v1610 = vmul.f32 %v1604, %v1537
            %v1611 = vmul.f32 %v1608, %v1545
            %v1612 = vadd.f32 %v1600, %v1610
            %v1613 = vadd.f32 %v1601, %v1611
            %1614 = vset.pattern.permute.xlu0 5
            %1615 = vperm.xlu0 %1614, %v1550
            %v1616 = vpop.permute.xlu0 %1615
            %1618 = vset.pattern.permute.xlu0 5
            %1619 = vperm.xlu0 %1618, %v1551
            %v1620 = vpop.permute.xlu0 %1619
            %v1622 = vmul.f32 %v1616, %v1538
            %v1623 = vmul.f32 %v1620, %v1546
            %v1624 = vadd.f32 %v1612, %v1622
            %v1625 = vadd.f32 %v1613, %v1623
            %1626 = vset.pattern.permute.xlu0 6
            %1627 = vperm.xlu0 %1626, %v1550
            %v1628 = vpop.permute.xlu0 %1627
            %1630 = vset.pattern.permute.xlu0 6
            %1631 = vperm.xlu0 %1630, %v1551
            %v1632 = vpop.permute.xlu0 %1631
            %v1634 = vmul.f32 %v1628, %v1539
            %v1635 = vmul.f32 %v1632, %v1547
            %v1636 = vadd.f32 %v1624, %v1634
            %v1637 = vadd.f32 %v1625, %v1635
            %1638 = vset.pattern.permute.xlu0 7
            %1639 = vperm.xlu0 %1638, %v1550
            %v1640 = vpop.permute.xlu0 %1639
            %1642 = vset.pattern.permute.xlu0 7
            %1643 = vperm.xlu0 %1642, %v1551
            %v1644 = vpop.permute.xlu0 %1643
            %v1646 = vmul.f32 %v1640, %v1540
            %v1647 = vmul.f32 %v1644, %v1548
            %v1648 = vadd.f32 %v1636, %v1646
            %v1649 = vadd.f32 %v1637, %v1647
          $region61: #{wigner_kernel_forward.1} parent=55 // loop_footer
            %s1527 = sadd.s32 1, %s1523
          $region62: #{wigner_kernel_forward.1} parent=55 // loop_footer_branch
            %1522 = sbr.rel target = $region58
          $region63: #{wigner_kernel_forward.1} parent=55 // loop_exit
            _
          %v1650 = vld [vmem:[#allocation4] sm:$0xff]
          %v1651 = vld [vmem:[#allocation4 + $0x8] sm:$0xff]
          %v1652 = vmul.f32 %v1528, %v1650
          %v1653 = vmul.f32 %v1529, %v1651
          %1654 = vadd.xlane.f32.xlu0 %v1652
          %v1655 = vpop.xlane.xlu0 %1654
          %1656 = vadd.xlane.f32.xlu0 %v1653
          %v1657 = vpop.xlane.xlu0 %1656
          %vm1658 = vcmask 7168
          %1659 = vst.msk [vmem:[%s4] sm:$0xff] %vm1658, %v1655
          %1660 = vst.msk [vmem:[%s4 + $0x8] sm:$0xff] %vm1658, %v1657
        $region56: #{wigner_kernel_forward.1} parent=35 // pred_fallthru
          _
        // Predicated region
        $region64: #{wigner_kernel_forward.1} parent=35 // pred_check
          %p1661 = pneg %p126
        $region65: #{wigner_kernel_forward.1} parent=35 // pred_check_branch
          %1663 = sbr.rel (%p1661) target = $region67
        $region66: #{wigner_kernel_forward.1} parent=35 // pred_region
          _
        $region67: #{wigner_kernel_forward.1} parent=35 // pred_fallthru
          _
        // Predicated region
        $region68: #{wigner_kernel_forward.1} parent=35 // pred_check
          %p1664 = pneg %p126
        $region69: #{wigner_kernel_forward.1} parent=35 // pred_check_branch
          %1666 = sbr.rel (%p1664) target = $region71
        $region70: #{wigner_kernel_forward.1} parent=35 // pred_region
          _
        $region71: #{wigner_kernel_forward.1} parent=35 // pred_fallthru
          _
      $region36: #{wigner_kernel_forward.1} parent=5 // pred_fallthru
        _
      %p1667 = scmp.le.s32.totalorder 2, %s14
      // Predicated region
      $region72: #{wigner_kernel_forward.1} parent=5 // pred_check
        %p1668 = pneg %p1667
      $region73: #{wigner_kernel_forward.1} parent=5 // pred_check_branch
        %1670 = sbr.rel (%p1668) target = $region75
      $region74: #{wigner_kernel_forward.1} parent=5 // pred_region
        %s1671 = ssub.s32 %s14, 2
      $region75: #{wigner_kernel_forward.1} parent=5 // pred_fallthru
        _
    $region6: #{wigner_kernel_forward.1} parent=1 // loop_footer
      %s18 = sadd.s32 1, %s14
    $region7: #{wigner_kernel_forward.1} parent=1 // loop_footer_branch
      %13 = sbr.rel target = $region3
    $region8: #{wigner_kernel_forward.1} parent=1 // loop_exit
      _
    %1672 = vsyncpa [#allocation7], 1
    %s1673 = scalar_lea.sflag [#allocation7], 1
    %1674 = vsyncpa %s1673, 1
    %1675 = vsyncpa [#allocation9], 1
    %s1676 = scalar_lea.sflag [#allocation9], 1
    %1677 = vsyncpa %s1676, 1

</llo_original>
